<compile_context>
chip_gen: v6e
topology: v6e:2x2x1
jax: 0.10.0
libtpu: 0.0.40
codegen_flags: <defaults>
</compile_context>

<pallas_src>
import functools
import math

import jax
import jax.numpy as jnp
from jax.experimental import pallas as pl
from jax.experimental.pallas import tpu as pltpu


# ---------------------------------------------------------------------------
# Kernel 1: Q/K/V input projections (row-tiled), bf16 MXU operands, f32 accumulate.
# Outputs are written in head-split (B, H, S, d_k) bf16 layout with a single
# unmasked store per projection.
# ---------------------------------------------------------------------------
def qkv_proj_kernel(xq_ref, xk_ref, xv_ref,
                    wq_ref, bq_ref, wk_ref, bk_ref, wv_ref, bv_ref,
                    qo_ref, ko_ref, vo_ref, *, num_heads, d_k):
    def proj(x_ref, w_ref, b_ref, o_ref):
        x = x_ref[0].astype(jnp.bfloat16)                                   # (TR, D)
        y = jnp.dot(x, w_ref[...], preferred_element_type=jnp.float32) + b_ref[0]
        tr = y.shape[0]
        # Head split: one reshape + one transpose (last/lane dim unchanged) and a
        # single dense store, instead of H masked partial stores that cross
        # (8,128) lane-tile boundaries.
        yh = jnp.transpose(y.reshape(tr, num_heads, d_k), (1, 0, 2))        # (H, TR, d_k)
        o_ref[0] = yh.astype(o_ref.dtype)

    proj(xq_ref, wq_ref, bq_ref, qo_ref)
    proj(xk_ref, wk_ref, bk_ref, ko_ref)
    proj(xv_ref, wv_ref, bv_ref, vo_ref)


# ---------------------------------------------------------------------------
# Kernel 2: flash-attention style MHA with fused W_o output projection.
# grid = (batch, q-tiles, kv-tiles); kv axis is the "arbitrary" reduction axis.
# 1/sqrt(d_k) is already folded into the Q projection weights.
# ---------------------------------------------------------------------------
def flash_mha_kernel(q_ref, k_ref, v_ref, mask_ref, wo_ref, bo_ref,
                     out_ref, m_scr, l_scr, acc_scr, *, exp_in_bf16):
    ki = pl.program_id(2)

    @pl.when(ki == 0)
    def _init():
        m_scr[...] = jnp.full(m_scr.shape, -jnp.inf, dtype=m_scr.dtype)
        l_scr[...] = jnp.zeros(l_scr.shape, dtype=l_scr.dtype)
        acc_scr[...] = jnp.zeros(acc_scr.shape, dtype=acc_scr.dtype)

    qh = q_ref[0]                              # (H, TQ,  d_k) bf16 (pre-scaled)
    kh = k_ref[0]                              # (H, TKV, d_k) bf16
    vh = v_ref[0]                              # (H, TKV, d_k) bf16

    # Head-batched scores on the MXU; f32 accumulation. No scale multiply here.
    s = jnp.einsum('hqd,hkd->hqk', qh, kh,
                   preferred_element_type=jnp.float32)                      # (H, TQ, TKV)

    # One int8 compare per (q,kv) tile, broadcast over all heads (no f32 unpack).
    masked = mask_ref[0] != 0                                               # (TQ, TKV) bool
    s = jnp.where(masked[None, :, :], jnp.float32(-1e9), s)
    # TODO(synk): for causal masks, scalar-prefetch a per-(qi,ki) block mask and
    # pl.when-skip fully-masked kv tiles (~2x fewer iterations); kept generic-mask
    # semantics (incl. fully-masked rows -> uniform attention) here.

    # Online softmax update; running state stays f32.
    m_prev = m_scr[...]
    m_new = jnp.maximum(m_prev, jnp.max(s, axis=-1, keepdims=True))
    alpha = jnp.exp(m_prev - m_new)                                         # (H, TQ, 1) f32
    if exp_in_bf16:
        # v6e/v7x: bf16 EUP runs ~2x; p is cast to bf16 for the PV matmul anyway.
        p = jnp.exp((s - m_new).astype(jnp.bfloat16))                       # (H, TQ, TKV) bf16
        row_sum = jnp.sum(p, axis=-1, keepdims=True, dtype=jnp.float32)
    else:
        # v5e / older: no bf16 EUP -> keep exp in f32.
        p_f32 = jnp.exp(s - m_new)
        row_sum = jnp.sum(p_f32, axis=-1, keepdims=True)
        p = p_f32.astype(jnp.bfloat16)
    l_scr[...] = alpha * l_scr[...] + row_sum
    acc_scr[...] = alpha * acc_scr[...] + jnp.einsum(
        'hqk,hkd->hqd', p, vh, preferred_element_type=jnp.float32)
    m_scr[...] = m_new

    @pl.when(ki == pl.num_programs(2) - 1)
    def _finalize():
        # Softmax denominator on the EUP (approx reciprocal ~ free slot).
        ctx = acc_scr[...] * pl.reciprocal(l_scr[...], approx=True)         # (H, TQ, d_k) f32
        h, tq, dk = ctx.shape
        # One transpose (minor dim fixed) + lane merge, then a single full-K
        # (TQ, D) x (D, D) MXU matmul for W_o (no per-head K=d_k matmuls, no
        # register-resident f32 accumulator to spill).
        ctx2 = jnp.transpose(ctx, (1, 0, 2)).reshape(tq, h * dk).astype(jnp.bfloat16)
        o = jnp.dot(ctx2, wo_ref[...], preferred_element_type=jnp.float32)
        out_ref[0] = (o + bo_ref[0]).astype(out_ref.dtype)


# ---------------------------------------------------------------------------
# Wrapper
# ---------------------------------------------------------------------------
def multi_head_attn_forward(k, v, q, mask, params, num_heads,
                            *, tq=None, tkv=None, tr=None):
    """Pallas forward matching MultiHeadAttn(d_model, num_heads, attn_type='dot').

    Argument order matches the PyTorch module: forward(k, v, q, mask).
    `mask` is an int8 (B, S, S) array; nonzero == masked (torch `mask == True`).
    """
    B, S, D = q.shape
    assert D % num_heads == 0
    d_k = D // num_heads

    # Big tiles by default (overhead ~0.35us per grid step; tkv multiple of 256
    # fills the 256-wide MXUs on v6e/v7x). Clamped to S; tunable by caller.
    tq = min(S, 256) if tq is None else tq
    tkv = min(S, 512) if tkv is None else tkv
    tr = min(S, 256) if tr is None else tr
    assert S % tq == 0 and S % tkv == 0 and S % tr == 0

    f32, bf16 = jnp.float32, jnp.bfloat16
    mask = mask.astype(jnp.int8)

    # bf16 weights (native MXU operand dtype, half the HBM/VMEM footprint).
    # Fold 1/sqrt(d_k) into W_q / b_q once on the host (removes a per-step
    # (H, tq, tkv) VPU multiply from the kernel).
    scale = 1.0 / math.sqrt(d_k)
    wq = (params['wq'] * scale).astype(bf16)
    bq = (params['bq'] * scale).astype(f32)
    wk = params['wk'].astype(bf16)
    bk = params['bk'].astype(f32)
    wv = params['wv'].astype(bf16)
    bv = params['bv'].astype(f32)
    wo = params['wo'].astype(bf16)
    bo = params['bo'].astype(f32)

    # bf16 exp only where the EUP supports it natively (v6e / v7x).
    device_kind = jax.devices()[0].device_kind.lower()
    exp_in_bf16 = ('v6' in device_kind) or ('v7' in device_kind)

    # The PyTorch module routes forward's (q, k, v) into scaled_dot_product_attn's
    # (k, v, q) parameters: W_q acts on forward's v, W_k on q, W_v on k.
    x_for_wq, x_for_wk, x_for_wv = v, q, k

    vmem_limit = 64 * 1024 * 1024
    # TODO(synk): at d_model >= 2k (esp. v7x 64 MiB VMEM), single-buffer the
    # constant (D,D) weight blocks (pipeline_mode=pl.Buffered(1)) or K-tile the
    # projection contraction; unnecessary at these sizes.

    # ---- Kernel 1: projections, head-split bf16 outputs -----------------------
    act_spec = pl.BlockSpec((1, tr, D), lambda b, r: (b, r, 0))
    w_spec = pl.BlockSpec((D, D), lambda b, r: (0, 0))
    bias_spec = pl.BlockSpec((1, D), lambda b, r: (0, 0))
    head_out_spec = pl.BlockSpec((1, num_heads, tr, d_k), lambda b, r: (b, 0, r, 0))
    head_shape = jax.ShapeDtypeStruct((B, num_heads, S, d_k), bf16)

    cost1 = pl.CostEstimate(
        flops=3 * 2 * B * S * D * D,
        transcendentals=0,
        bytes_accessed=3 * B * S * D * 4 + 3 * D * D * 2 + 3 * B * S * D * 2)

    q_h, k_h, v_h = pl.pallas_call(
        functools.partial(qkv_proj_kernel, num_heads=num_heads, d_k=d_k),
        out_shape=(head_shape, head_shape, head_shape),
        grid=(B, S // tr),
        in_specs=[act_spec, act_spec, act_spec,
                  w_spec, bias_spec, w_spec, bias_spec, w_spec, bias_spec],
        out_specs=(head_out_spec, head_out_spec, head_out_spec),
        compiler_params=pltpu.CompilerParams(
            dimension_semantics=("parallel", "parallel"),
            vmem_limit_bytes=vmem_limit),
        cost_estimate=cost1,
    )(x_for_wq, x_for_wk, x_for_wv, wq, bq, wk, bk, wv, bv)

    # ---- Kernel 2: flash attention (online softmax over kv tiles) + fused W_o --
    H = num_heads
    n_qtiles = S // tq
    cost2 = pl.CostEstimate(
        flops=4 * B * H * S * S * d_k + 2 * B * S * D * D,
        transcendentals=B * H * S * S,
        bytes_accessed=(B * S * D * 2                      # Q (bf16, once)
                        + 2 * B * S * D * 2 * n_qtiles     # K/V re-streamed per q-tile
                        + B * S * S                        # int8 mask
                        + D * D * 2 + B * S * D * 4))      # W_o + f32 output

    out = pl.pallas_call(
        functools.partial(flash_mha_kernel, exp_in_bf16=exp_in_bf16),
        out_shape=jax.ShapeDtypeStruct((B, S, D), q.dtype),
        grid=(B, S // tq, S // tkv),
        in_specs=[
            pl.BlockSpec((1, num_heads, tq, d_k), lambda b, qi, ki: (b, 0, qi, 0)),
            pl.BlockSpec((1, num_heads, tkv, d_k), lambda b, qi, ki: (b, 0, ki, 0)),
            pl.BlockSpec((1, num_heads, tkv, d_k), lambda b, qi, ki: (b, 0, ki, 0)),
            pl.BlockSpec((1, tq, tkv), lambda b, qi, ki: (b, qi, ki)),       # int8 mask
            pl.BlockSpec((D, D), lambda b, qi, ki: (0, 0)),                  # W_o (bf16)
            pl.BlockSpec((1, D), lambda b, qi, ki: (0, 0)),                  # b_o (f32)
        ],
        out_specs=pl.BlockSpec((1, tq, D), lambda b, qi, ki: (b, qi, 0)),
        scratch_shapes=[
            pltpu.VMEM((num_heads, tq, 1), f32),     # running max
            pltpu.VMEM((num_heads, tq, 1), f32),     # running denominator
            pltpu.VMEM((num_heads, tq, d_k), f32),   # context accumulator
        ],
        compiler_params=pltpu.CompilerParams(
            dimension_semantics=("parallel", "parallel", "arbitrary"),
            vmem_limit_bytes=vmem_limit),
        cost_estimate=cost2,
    )(q_h, k_h, v_h, mask, wo, bo)
    return out


# ---------------------------------------------------------------------------
# Pure-JAX reference (mirrors the PyTorch forward exactly, dropout = identity)
# ---------------------------------------------------------------------------
def reference(k, v, q, mask_bool, params, num_heads):
    # forward(k, v, q, mask) -> scaled_dot_product_attn(q, k, v, mask) whose
    # parameters are (k, v, q, mask):
    k_arg, v_arg, q_arg = q, k, v
    B, S, D = k_arg.shape
    d_k = D // num_heads

    def lin(x, w, b):
        return x @ w + b[0]

    def split(t):
        return t.reshape(B, S, num_heads, d_k).transpose(0, 2, 1, 3)

    qh = split(lin(q_arg, params['wq'], params['bq']))
    kh = split(lin(k_arg, params['wk'], params['bk']))
    vh = split(lin(v_arg, params['wv'], params['bv']))
    s = jnp.einsum('bhqd,bhkd->bhqk', qh, kh) / jnp.sqrt(jnp.float32(d_k))
    s = jnp.where(mask_bool[:, None], jnp.float32(-1e9), s)
    p = jax.nn.softmax(s, axis=-1)
    o = jnp.einsum('bhqk,bhkd->bhqd', p, vh).transpose(0, 2, 1, 3).reshape(B, S, D)
    return o @ params['wo'] + params['bo'][0]


# ---------------------------------------------------------------------------
# Main
# ---------------------------------------------------------------------------
if __name__ == "__main__":
    B, S, D, H = 2, 8, 32, 4

    key = jax.random.PRNGKey(0)
    keys = jax.random.split(key, 12)

    def mat(kk, shape, scale=0.05):
        return (scale * jax.random.normal(kk, shape)).astype(jnp.float32)

    params = {
        'wq': mat(keys[0], (D, D)), 'bq': mat(keys[1], (1, D)),
        'wk': mat(keys[2], (D, D)), 'bk': mat(keys[3], (1, D)),
        'wv': mat(keys[4], (D, D)), 'bv': mat(keys[5], (1, D)),
        'wo': mat(keys[6], (D, D)), 'bo': mat(keys[7], (1, D)),
    }

    q_in = jax.random.normal(keys[8], (B, S, D), dtype=jnp.float32)
    k_in = jax.random.normal(keys[9], (B, S, D), dtype=jnp.float32)
    v_in = jax.random.normal(keys[10], (B, S, D), dtype=jnp.float32)

    # Causal ("subsequent") mask: True (masked) where key index > query index.
    mask_bool = jnp.broadcast_to(
        jnp.triu(jnp.ones((S, S), jnp.int32), k=1).astype(jnp.bool_), (B, S, S))
    mask_i8 = mask_bool.astype(jnp.int8)

    out = multi_head_attn_forward(k_in, v_in, q_in, mask_i8, params, num_heads=H)
    out = jax.block_until_ready(out)

    ref = reference(k_in, v_in, q_in, mask_bool, params, num_heads=H)

    assert out.shape == (B, S, D)
    # bf16 matmul operands (f32 accumulation), bf16 exp on v6e/v7x and approx
    # reciprocal -> looser tolerance than a pure-f32 implementation.
    assert jnp.allclose(out, ref, atol=1e-2, rtol=1e-2), (
        f"max abs diff = {jnp.max(jnp.abs(out - ref))}")

    # TODO(synk): dropout implemented as identity (inference); training-time
    # dropout would need pltpu.prng_* inside the kernel.
    # TODO(synk): attn_type='additive' branch of the module is not implemented
    # (module default 'dot' only).
    print("KERNEL_OK")
</pallas_src>

<mosaic_0001>
module attributes {stable_mosaic.version = 11 : i64} {
  func.func @qkv_proj_kernel(%arg0: i32, %arg1: i32, %arg2: memref<1x8x32xf32, #tpu.memory_space<vmem>>, %arg3: memref<1x8x32xf32, #tpu.memory_space<vmem>>, %arg4: memref<1x8x32xf32, #tpu.memory_space<vmem>>, %arg5: memref<32x32xbf16, #tpu.memory_space<vmem>>, %arg6: memref<1x32xf32, #tpu.memory_space<vmem>>, %arg7: memref<32x32xbf16, #tpu.memory_space<vmem>>, %arg8: memref<1x32xf32, #tpu.memory_space<vmem>>, %arg9: memref<32x32xbf16, #tpu.memory_space<vmem>>, %arg10: memref<1x32xf32, #tpu.memory_space<vmem>>, %arg11: memref<1x4x8x8xbf16, #tpu.memory_space<vmem>>, %arg12: memref<1x4x8x8xbf16, #tpu.memory_space<vmem>>, %arg13: memref<1x4x8x8xbf16, #tpu.memory_space<vmem>>) attributes {dimension_semantics = [#tpu.dimension_semantics<parallel>, #tpu.dimension_semantics<parallel>], iteration_bounds = array<i64: 2, 1>, scalar_prefetch = 0 : i64, scratch_operands = 0 : i64, tpu.core_type = #tpu.core_type<tc>, window_params = [{transform_indices = @transform_0, window_bounds = array<i64: 1, 8, 32>}, {transform_indices = @transform_1, window_bounds = array<i64: 1, 8, 32>}, {transform_indices = @transform_2, window_bounds = array<i64: 1, 8, 32>}, {pipeline_mode = #tpu.pipeline_mode<synchronous>, transform_indices = @transform_3, window_bounds = array<i64: 32, 32>}, {pipeline_mode = #tpu.pipeline_mode<synchronous>, transform_indices = @transform_4, window_bounds = array<i64: 1, 32>}, {pipeline_mode = #tpu.pipeline_mode<synchronous>, transform_indices = @transform_5, window_bounds = array<i64: 32, 32>}, {pipeline_mode = #tpu.pipeline_mode<synchronous>, transform_indices = @transform_6, window_bounds = array<i64: 1, 32>}, {pipeline_mode = #tpu.pipeline_mode<synchronous>, transform_indices = @transform_7, window_bounds = array<i64: 32, 32>}, {pipeline_mode = #tpu.pipeline_mode<synchronous>, transform_indices = @transform_8, window_bounds = array<i64: 1, 32>}, {transform_indices = @transform_9, window_bounds = array<i64: 1, 4, 8, 8>}, {transform_indices = @transform_10, window_bounds = array<i64: 1, 4, 8, 8>}, {transform_indices = @transform_11, window_bounds = array<i64: 1, 4, 8, 8>}]} {
    %c0 = arith.constant 0 : index
    %c0_0 = arith.constant 0 : index
    %c0_1 = arith.constant 0 : index
    %0 = vector.load %arg2[%c0, %c0_0, %c0_1] : memref<1x8x32xf32, #tpu.memory_space<vmem>>, vector<1x8x32xf32>
    %1 = vector.shape_cast %0 : vector<1x8x32xf32> to vector<8x32xf32>
    %2 = arith.truncf %1 : vector<8x32xf32> to vector<8x32xbf16>
    %c0_2 = arith.constant 0 : index
    %c0_3 = arith.constant 0 : index
    %3 = vector.load %arg5[%c0_2, %c0_3] : memref<32x32xbf16, #tpu.memory_space<vmem>>, vector<32x32xbf16>
    %cst = arith.constant dense<0.000000e+00> : vector<8x32xf32>
    %4 = tpu.matmul %2, %3, %cst {dimension_numbers = #tpu.dot_dimension_numbers<[1], [0], [0], [1], [0, 0, 1, 1], [], []>} : vector<8x32xbf16>, vector<32x32xbf16>, vector<8x32xf32> -> vector<8x32xf32>
    %c0_4 = arith.constant 0 : index
    %c0_5 = arith.constant 0 : index
    %5 = vector.load %arg6[%c0_4, %c0_5] : memref<1x32xf32, #tpu.memory_space<vmem>>, vector<1x32xf32>
    %6 = vector.shape_cast %5 : vector<1x32xf32> to vector<32xf32>
    %7 = vector.shape_cast %6 : vector<32xf32> to vector<1x32xf32>
    %8 = vector.broadcast %7 : vector<1x32xf32> to vector<8x32xf32>
    %9 = arith.addf %4, %8 : vector<8x32xf32>
    %10 = vector.shape_cast %9 : vector<8x32xf32> to vector<8x4x8xf32>
    %11 = tpu.transpose %10, [1, 0, 2] : vector<8x4x8xf32> -> vector<4x8x8xf32>
    %12 = arith.truncf %11 : vector<4x8x8xf32> to vector<4x8x8xbf16>
    %c0_6 = arith.constant 0 : index
    %c0_7 = arith.constant 0 : index
    %c0_8 = arith.constant 0 : index
    %c0_9 = arith.constant 0 : index
    %13 = vector.load %arg11[%c0_6, %c0_7, %c0_8, %c0_9] : memref<1x4x8x8xbf16, #tpu.memory_space<vmem>>, vector<1x4x8x8xbf16>
    %14 = vector.shape_cast %13 : vector<1x4x8x8xbf16> to vector<4x8x8xbf16>
    %15 = vector.shape_cast %12 : vector<4x8x8xbf16> to vector<1x4x8x8xbf16>
    tpu.vector_store %arg11[%c0_6, %c0_7, %c0_8, %c0_9], %15 {strides = array<i32>} : memref<1x4x8x8xbf16, #tpu.memory_space<vmem>>, vector<1x4x8x8xbf16>,
    %c0_10 = arith.constant 0 : index
    %c0_11 = arith.constant 0 : index
    %c0_12 = arith.constant 0 : index
    %16 = vector.load %arg3[%c0_10, %c0_11, %c0_12] : memref<1x8x32xf32, #tpu.memory_space<vmem>>, vector<1x8x32xf32>
    %17 = vector.shape_cast %16 : vector<1x8x32xf32> to vector<8x32xf32>
    %18 = arith.truncf %17 : vector<8x32xf32> to vector<8x32xbf16>
    %c0_13 = arith.constant 0 : index
    %c0_14 = arith.constant 0 : index
    %19 = vector.load %arg7[%c0_13, %c0_14] : memref<32x32xbf16, #tpu.memory_space<vmem>>, vector<32x32xbf16>
    %cst_15 = arith.constant dense<0.000000e+00> : vector<8x32xf32>
    %20 = tpu.matmul %18, %19, %cst_15 {dimension_numbers = #tpu.dot_dimension_numbers<[1], [0], [0], [1], [0, 0, 1, 1], [], []>} : vector<8x32xbf16>, vector<32x32xbf16>, vector<8x32xf32> -> vector<8x32xf32>
    %c0_16 = arith.constant 0 : index
    %c0_17 = arith.constant 0 : index
    %21 = vector.load %arg8[%c0_16, %c0_17] : memref<1x32xf32, #tpu.memory_space<vmem>>, vector<1x32xf32>
    %22 = vector.shape_cast %21 : vector<1x32xf32> to vector<32xf32>
    %23 = vector.shape_cast %22 : vector<32xf32> to vector<1x32xf32>
    %24 = vector.broadcast %23 : vector<1x32xf32> to vector<8x32xf32>
    %25 = arith.addf %20, %24 : vector<8x32xf32>
    %26 = vector.shape_cast %25 : vector<8x32xf32> to vector<8x4x8xf32>
    %27 = tpu.transpose %26, [1, 0, 2] : vector<8x4x8xf32> -> vector<4x8x8xf32>
    %28 = arith.truncf %27 : vector<4x8x8xf32> to vector<4x8x8xbf16>
    %c0_18 = arith.constant 0 : index
    %c0_19 = arith.constant 0 : index
    %c0_20 = arith.constant 0 : index
    %c0_21 = arith.constant 0 : index
    %29 = vector.load %arg12[%c0_18, %c0_19, %c0_20, %c0_21] : memref<1x4x8x8xbf16, #tpu.memory_space<vmem>>, vector<1x4x8x8xbf16>
    %30 = vector.shape_cast %29 : vector<1x4x8x8xbf16> to vector<4x8x8xbf16>
    %31 = vector.shape_cast %28 : vector<4x8x8xbf16> to vector<1x4x8x8xbf16>
    tpu.vector_store %arg12[%c0_18, %c0_19, %c0_20, %c0_21], %31 {strides = array<i32>} : memref<1x4x8x8xbf16, #tpu.memory_space<vmem>>, vector<1x4x8x8xbf16>,
    %c0_22 = arith.constant 0 : index
    %c0_23 = arith.constant 0 : index
    %c0_24 = arith.constant 0 : index
    %32 = vector.load %arg4[%c0_22, %c0_23, %c0_24] : memref<1x8x32xf32, #tpu.memory_space<vmem>>, vector<1x8x32xf32>
    %33 = vector.shape_cast %32 : vector<1x8x32xf32> to vector<8x32xf32>
    %34 = arith.truncf %33 : vector<8x32xf32> to vector<8x32xbf16>
    %c0_25 = arith.constant 0 : index
    %c0_26 = arith.constant 0 : index
    %35 = vector.load %arg9[%c0_25, %c0_26] : memref<32x32xbf16, #tpu.memory_space<vmem>>, vector<32x32xbf16>
    %cst_27 = arith.constant dense<0.000000e+00> : vector<8x32xf32>
    %36 = tpu.matmul %34, %35, %cst_27 {dimension_numbers = #tpu.dot_dimension_numbers<[1], [0], [0], [1], [0, 0, 1, 1], [], []>} : vector<8x32xbf16>, vector<32x32xbf16>, vector<8x32xf32> -> vector<8x32xf32>
    %c0_28 = arith.constant 0 : index
    %c0_29 = arith.constant 0 : index
    %37 = vector.load %arg10[%c0_28, %c0_29] : memref<1x32xf32, #tpu.memory_space<vmem>>, vector<1x32xf32>
    %38 = vector.shape_cast %37 : vector<1x32xf32> to vector<32xf32>
    %39 = vector.shape_cast %38 : vector<32xf32> to vector<1x32xf32>
    %40 = vector.broadcast %39 : vector<1x32xf32> to vector<8x32xf32>
    %41 = arith.addf %36, %40 : vector<8x32xf32>
    %42 = vector.shape_cast %41 : vector<8x32xf32> to vector<8x4x8xf32>
    %43 = tpu.transpose %42, [1, 0, 2] : vector<8x4x8xf32> -> vector<4x8x8xf32>
    %44 = arith.truncf %43 : vector<4x8x8xf32> to vector<4x8x8xbf16>
    %c0_30 = arith.constant 0 : index
    %c0_31 = arith.constant 0 : index
    %c0_32 = arith.constant 0 : index
    %c0_33 = arith.constant 0 : index
    %45 = vector.load %arg13[%c0_30, %c0_31, %c0_32, %c0_33] : memref<1x4x8x8xbf16, #tpu.memory_space<vmem>>, vector<1x4x8x8xbf16>
    %46 = vector.shape_cast %45 : vector<1x4x8x8xbf16> to vector<4x8x8xbf16>
    %47 = vector.shape_cast %44 : vector<4x8x8xbf16> to vector<1x4x8x8xbf16>
    tpu.vector_store %arg13[%c0_30, %c0_31, %c0_32, %c0_33], %47 {strides = array<i32>} : memref<1x4x8x8xbf16, #tpu.memory_space<vmem>>, vector<1x4x8x8xbf16>,
    return
  }
  func.func @transform_0(%arg0: i32, %arg1: i32) -> (i32, i32, i32) {
    %c0_i32 = arith.constant 0 : i32
    %c0_i32_0 = arith.constant 0 : i32
    return %arg0, %arg1, %c0_i32 : i32, i32, i32
  }
  func.func @transform_1(%arg0: i32, %arg1: i32) -> (i32, i32, i32) {
    %c0_i32 = arith.constant 0 : i32
    %c0_i32_0 = arith.constant 0 : i32
    return %arg0, %arg1, %c0_i32 : i32, i32, i32
  }
  func.func @transform_2(%arg0: i32, %arg1: i32) -> (i32, i32, i32) {
    %c0_i32 = arith.constant 0 : i32
    %c0_i32_0 = arith.constant 0 : i32
    return %arg0, %arg1, %c0_i32 : i32, i32, i32
  }
  func.func @transform_3(%arg0: i32, %arg1: i32) -> (i32, i32) {
    %c0_i32 = arith.constant 0 : i32
    %c0_i32_0 = arith.constant 0 : i32
    %c0_i32_1 = arith.constant 0 : i32
    return %c0_i32, %c0_i32_0 : i32, i32
  }
  func.func @transform_4(%arg0: i32, %arg1: i32) -> (i32, i32) {
    %c0_i32 = arith.constant 0 : i32
    %c0_i32_0 = arith.constant 0 : i32
    %c0_i32_1 = arith.constant 0 : i32
    return %c0_i32, %c0_i32_0 : i32, i32
  }
  func.func @transform_5(%arg0: i32, %arg1: i32) -> (i32, i32) {
    %c0_i32 = arith.constant 0 : i32
    %c0_i32_0 = arith.constant 0 : i32
    %c0_i32_1 = arith.constant 0 : i32
    return %c0_i32, %c0_i32_0 : i32, i32
  }
  func.func @transform_6(%arg0: i32, %arg1: i32) -> (i32, i32) {
    %c0_i32 = arith.constant 0 : i32
    %c0_i32_0 = arith.constant 0 : i32
    %c0_i32_1 = arith.constant 0 : i32
    return %c0_i32, %c0_i32_0 : i32, i32
  }
  func.func @transform_7(%arg0: i32, %arg1: i32) -> (i32, i32) {
    %c0_i32 = arith.constant 0 : i32
    %c0_i32_0 = arith.constant 0 : i32
    %c0_i32_1 = arith.constant 0 : i32
    return %c0_i32, %c0_i32_0 : i32, i32
  }
  func.func @transform_8(%arg0: i32, %arg1: i32) -> (i32, i32) {
    %c0_i32 = arith.constant 0 : i32
    %c0_i32_0 = arith.constant 0 : i32
    %c0_i32_1 = arith.constant 0 : i32
    return %c0_i32, %c0_i32_0 : i32, i32
  }
  func.func @transform_9(%arg0: i32, %arg1: i32) -> (i32, i32, i32, i32) {
    %c0_i32 = arith.constant 0 : i32
    %c0_i32_0 = arith.constant 0 : i32
    %c0_i32_1 = arith.constant 0 : i32
    return %arg0, %c0_i32, %arg1, %c0_i32_0 : i32, i32, i32, i32
  }
  func.func @transform_10(%arg0: i32, %arg1: i32) -> (i32, i32, i32, i32) {
    %c0_i32 = arith.constant 0 : i32
    %c0_i32_0 = arith.constant 0 : i32
    %c0_i32_1 = arith.constant 0 : i32
    return %arg0, %c0_i32, %arg1, %c0_i32_0 : i32, i32, i32, i32
  }
  func.func @transform_11(%arg0: i32, %arg1: i32) -> (i32, i32, i32, i32) {
    %c0_i32 = arith.constant 0 : i32
    %c0_i32_0 = arith.constant 0 : i32
    %c0_i32_1 = arith.constant 0 : i32
    return %arg0, %c0_i32, %arg1, %c0_i32_0 : i32, i32, i32, i32
  }
}

</mosaic_0001>

<llo_original>
// kernel: tpu_custom_call.1
$region0: #{tpu_custom_call.1}
  #allocation0 [shape = 'u32[]', space=smem, size = 0x4, offset = 0x4, fixed_abs, tag = 'smem constant byte address 0x4 - core index']
  #allocation1 [shape = 'u32[144,128]{1,0:T(1,128)}', space=vmem, size = 0x12000, scoped, tag = 'internal scratch']
  %s0 = inlined_call_operand.hbm [shape: f32[2,8,32], index: 0, kind: input, shape index: {}]
  %s1 = inlined_call_operand.hbm [shape: f32[2,8,32], index: 1, kind: input, shape index: {}]
  %s2 = inlined_call_operand.hbm [shape: f32[2,8,32], index: 2, kind: input, shape index: {}]
  %s3 = inlined_call_operand.hbm [shape: bf16[32,32], index: 3, kind: input, shape index: {}]
  %s4 = inlined_call_operand.vmem [shape: f32[1,32], index: 4, kind: input, shape index: {}]
  %s5 = inlined_call_operand.hbm [shape: bf16[32,32], index: 5, kind: input, shape index: {}]
  %s6 = inlined_call_operand.vmem [shape: f32[1,32], index: 6, kind: input, shape index: {}]
  %s7 = inlined_call_operand.hbm [shape: bf16[32,32], index: 7, kind: input, shape index: {}]
  %s8 = inlined_call_operand.vmem [shape: f32[1,32], index: 8, kind: input, shape index: {}]
  %s9 = inlined_call_operand.hbm [shape: bf16[2,4,8,8], index: 9, kind: output, shape index: {0}]
  %s10 = inlined_call_operand.hbm [shape: bf16[2,4,8,8], index: 10, kind: output, shape index: {1}]
  %s11 = inlined_call_operand.hbm [shape: bf16[2,4,8,8], index: 11, kind: output, shape index: {2}]
  %12 = xla_tuple %s9, %s10, %s11
  %s13 = sld [smem:[#allocation0]]
  $region109: #{tpu_custom_call.1} parent=0
    _
  %s15 = ssub.s32 1, %s13
  %s16 = scalar_select 0, %s15, %s13
  $region1: #{tpu_custom_call.1} parent=0
    #allocation2 [shape = 'u8[8192]{0}', space=vmem, size = 0x2000, scoped, tag = 'input window, operand 0']
    #allocation3 [shape = 's32[2]{0}', space=sflag, size = 0x8, scoped, tag = 'scoped memory for tpu_custom_call.1']
    #allocation4 [shape = 's32[2]{0}', space=sflag, size = 0x8, scoped, tag = 'scoped memory for tpu_custom_call.1']
    #allocation5 [shape = 'u8[8192]{0}', space=vmem, size = 0x2000, scoped, tag = 'input window, operand 1']
    #allocation6 [shape = 's32[2]{0}', space=sflag, size = 0x8, scoped, tag = 'scoped memory for tpu_custom_call.1']
    #allocation7 [shape = 'u8[8192]{0}', space=vmem, size = 0x2000, scoped, tag = 'input window, operand 2']
    #allocation8 [shape = 'u8[8192]{0}', space=vmem, size = 0x2000, scoped, tag = 'input window, operand 3, single buffered']
    #allocation9 [shape = 's32[1]{0}', space=sflag, size = 0x4, scoped, tag = 'scoped memory for tpu_custom_call.1']
    #allocation10 [shape = 'u8[8192]{0}', space=vmem, size = 0x2000, scoped, tag = 'input window, operand 5, single buffered']
    #allocation11 [shape = 'u8[8192]{0}', space=vmem, size = 0x2000, scoped, tag = 'input window, operand 7, single buffered']
    #allocation12 [shape = 's32[1]{0}', space=sflag, size = 0x4, scoped, tag = 'scoped memory for tpu_custom_call.1']
    #allocation13 [shape = 'u8[16384]{0}', space=vmem, size = 0x4000, scoped, tag = 'output window, operand 0']
    #allocation14 [shape = 'u8[16384]{0}', space=vmem, size = 0x4000, scoped, tag = 'output window, operand 1']
    #allocation15 [shape = 's32[2]{0}', space=sflag, size = 0x8, scoped, tag = 'scoped memory for tpu_custom_call.1']
    #allocation16 [shape = 'u8[16384]{0}', space=vmem, size = 0x4000, scoped, tag = 'output window, operand 2']
    %17 = vsyncpa [#allocation3], 0
    %s18 = scalar_lea.sflag [#allocation3], 1
    %19 = vsyncpa %s18, 0
    %20 = vsyncpa [#allocation6], 0
    %s21 = scalar_lea.sflag [#allocation6], 1
    %22 = vsyncpa %s21, 0
    %23 = vsyncpa [#allocation9], 0
    %24 = vsyncpa [#allocation12], 0
    %25 = vsyncpa [#allocation4], 0
    %s26 = scalar_lea.sflag [#allocation4], 1
    %27 = vsyncpa %s26, 0
    %28 = vsyncpa [#allocation15], 0
    %s29 = scalar_lea.sflag [#allocation15], 1
    %30 = vsyncpa %s29, 0
    loop: start=0, step=1, limit=4
    $region2: #{tpu_custom_call.1} parent=1 // loop_pre_header
      _
    $region3: #{tpu_custom_call.1} parent=1 // loop_header
      %s32 = sphi 0, %s36
      %p33 = scmp.ge.s32.totalorder %s32, 4
      %s39 = sphi 0, %s51
      %s40 = sphi 0, %s47
      %s41 = sphi 0, %s39
      %s42 = sphi 0, %s40
      %s43 = sphi 0, %s41
      %s44 = sphi 0, %s42
      %s56 = sphi 0, %s58
      %s59 = sphi 0, %s56
      %s60 = sphi 0, %s59
      %s76 = sphi 0, %s60
      %s84 = sphi 0, %s86
      %s87 = sphi 0, %s84
      %s88 = sphi 0, %s87
      %s104 = sphi 0, %s88
      %s112 = sphi 0, %s114
      %s115 = sphi 0, %s112
      %s116 = sphi 0, %s115
      %s132 = sphi 0, %s116
      %s136 = sphi 0, %s136
      %s138 = sphi 0, %s136
      %s139 = sphi 0, %s138
      %s153 = sphi 0, %s139
      %s157 = sphi 0, %s157
      %s159 = sphi 0, %s157
      %s160 = sphi 0, %s159
      %s174 = sphi 0, %s160
      %s178 = sphi 0, %s178
      %s180 = sphi 0, %s178
      %s181 = sphi 0, %s180
      %s195 = sphi 0, %s181
      %s199 = sphi 0, %s199
      %s201 = sphi 0, %s199
      %s202 = sphi 0, %s201
      %s216 = sphi 0, %s202
      %s220 = sphi 0, %s220
      %s222 = sphi 0, %s220
      %s223 = sphi 0, %s222
      %s237 = sphi 0, %s223
      %s241 = sphi 0, %s241
      %s243 = sphi 0, %s241
      %s244 = sphi 0, %s243
      %s258 = sphi 0, %s244
      %s266 = sphi 0, %s268
      %s269 = sphi 0, %s266
      %s270 = sphi 0, %s269
      %s286 = sphi 0, %s270
      %s294 = sphi 0, %s296
      %s297 = sphi 0, %s294
      %s298 = sphi 0, %s297
      %s314 = sphi 0, %s298
      %s322 = sphi 0, %s324
      %s325 = sphi 0, %s322
      %s326 = sphi 0, %s325
      %s342 = sphi 0, %s326
    $region4: #{tpu_custom_call.1} parent=1 // loop_header_branch
      %35 = sbr.rel (%p33) target = $region8
    $region5: #{tpu_custom_call.1} parent=1 // loop_body
      %s37 = ssub.s32 %s32, 1
      %s38 = ssub.s32 %s32, 2
      %s45 = sadd.s32 1, %s40
      %p46 = scmp.ge.s32.totalorder %s45, 1
      %s47 = scalar_select %p46, 0, %s45
      %s48 = sadd.s32 1, %s39
      %s49 = scalar_select %p46, %s48, %s39
      %p50 = scmp.ge.s32.totalorder %s49, 2
      %s51 = scalar_select %p50, 0, %s49
      %s52 = ssub.s32 %s39, %s51
      %s53 = ssub.s32 %s40, %s47
      %s54 = sor.u32 %s52, %s53
      %p55 = scmp.eq.s32.totalorder %s54, 0
      %s57 = sadd.s32 %s56, 1
      %s58 = scalar_select %p55, %s56, %s57
      %p61 = pneg %p55
      %p62 = scmp.eq.s32.totalorder %s32, 1
      %p63 = por %p61, %p62
      %p64 = scmp.ne.s32.totalorder %s56, %s59
      %p65 = scmp.eq.s32.totalorder %s32, 0
      %p66 = por %p64, %p65
      %p67 = scmp.ne.s32.totalorder %s56, %s59
      %p68 = scmp.eq.s32.totalorder %s37, 1
      %p69 = por %p67, %p68
      %p70 = scmp.ne.s32.totalorder %s59, %s60
      %p71 = scmp.eq.s32.totalorder %s37, 0
      %p72 = por %p70, %p71
      %p73 = scmp.ne.s32.totalorder %s59, %s60
      %p74 = scmp.eq.s32.totalorder %s38, 1
      %p75 = por %p73, %p74
      %p77 = scmp.ne.s32.totalorder %s60, %s76
      %p78 = scmp.eq.s32.totalorder %s38, 0
      %p79 = por %p77, %p78
      %s80 = ssub.s32 %s39, %s51
      %s81 = ssub.s32 %s40, %s47
      %s82 = sor.u32 %s80, %s81
      %p83 = scmp.eq.s32.totalorder %s82, 0
      %s85 = sadd.s32 %s84, 1
      %s86 = scalar_select %p83, %s84, %s85
      %p89 = pneg %p83
      %p90 = scmp.eq.s32.totalorder %s32, 1
      %p91 = por %p89, %p90
      %p92 = scmp.ne.s32.totalorder %s84, %s87
      %p93 = scmp.eq.s32.totalorder %s32, 0
      %p94 = por %p92, %p93
      %p95 = scmp.ne.s32.totalorder %s84, %s87
      %p96 = scmp.eq.s32.totalorder %s37, 1
      %p97 = por %p95, %p96
      %p98 = scmp.ne.s32.totalorder %s87, %s88
      %p99 = scmp.eq.s32.totalorder %s37, 0
      %p100 = por %p98, %p99
      %p101 = scmp.ne.s32.totalorder %s87, %s88
      %p102 = scmp.eq.s32.totalorder %s38, 1
      %p103 = por %p101, %p102
      %p105 = scmp.ne.s32.totalorder %s88, %s104
      %p106 = scmp.eq.s32.totalorder %s38, 0
      %p107 = por %p105, %p106
      %s108 = ssub.s32 %s39, %s51
      %s109 = ssub.s32 %s40, %s47
      %s110 = sor.u32 %s108, %s109
      %p111 = scmp.eq.s32.totalorder %s110, 0
      %s113 = sadd.s32 %s112, 1
      %s114 = scalar_select %p111, %s112, %s113
      %p117 = pneg %p111
      %p118 = scmp.eq.s32.totalorder %s32, 1
      %p119 = por %p117, %p118
      %p120 = scmp.ne.s32.totalorder %s112, %s115
      %p121 = scmp.eq.s32.totalorder %s32, 0
      %p122 = por %p120, %p121
      %p123 = scmp.ne.s32.totalorder %s112, %s115
      %p124 = scmp.eq.s32.totalorder %s37, 1
      %p125 = por %p123, %p124
      %p126 = scmp.ne.s32.totalorder %s115, %s116
      %p127 = scmp.eq.s32.totalorder %s37, 0
      %p128 = por %p126, %p127
      %p129 = scmp.ne.s32.totalorder %s115, %s116
      %p130 = scmp.eq.s32.totalorder %s38, 1
      %p131 = por %p129, %p130
      %p133 = scmp.ne.s32.totalorder %s116, %s132
      %p134 = scmp.eq.s32.totalorder %s38, 0
      %p135 = por %p133, %p134
      %s137 = sadd.s32 %s136, 1
      %p140 = scmp.eq.s32.totalorder %s32, 1
      %p141 = scmp.ne.s32.totalorder %s136, %s138
      %p142 = scmp.eq.s32.totalorder %s32, 0
      %p143 = por %p141, %p142
      %p144 = scmp.ne.s32.totalorder %s136, %s138
      %p145 = scmp.eq.s32.totalorder %s37, 1
      %p146 = por %p144, %p145
      %p147 = scmp.ne.s32.totalorder %s138, %s139
      %p148 = scmp.eq.s32.totalorder %s37, 0
      %p149 = por %p147, %p148
      %p150 = scmp.ne.s32.totalorder %s138, %s139
      %p151 = scmp.eq.s32.totalorder %s38, 1
      %p152 = por %p150, %p151
      %p154 = scmp.ne.s32.totalorder %s139, %s153
      %p155 = scmp.eq.s32.totalorder %s38, 0
      %p156 = por %p154, %p155
      %s158 = sadd.s32 %s157, 1
      %p161 = scmp.eq.s32.totalorder %s32, 1
      %p162 = scmp.ne.s32.totalorder %s157, %s159
      %p163 = scmp.eq.s32.totalorder %s32, 0
      %p164 = por %p162, %p163
      %p165 = scmp.ne.s32.totalorder %s157, %s159
      %p166 = scmp.eq.s32.totalorder %s37, 1
      %p167 = por %p165, %p166
      %p168 = scmp.ne.s32.totalorder %s159, %s160
      %p169 = scmp.eq.s32.totalorder %s37, 0
      %p170 = por %p168, %p169
      %p171 = scmp.ne.s32.totalorder %s159, %s160
      %p172 = scmp.eq.s32.totalorder %s38, 1
      %p173 = por %p171, %p172
      %p175 = scmp.ne.s32.totalorder %s160, %s174
      %p176 = scmp.eq.s32.totalorder %s38, 0
      %p177 = por %p175, %p176
      %s179 = sadd.s32 %s178, 1
      %p182 = scmp.eq.s32.totalorder %s32, 1
      %p183 = scmp.ne.s32.totalorder %s178, %s180
      %p184 = scmp.eq.s32.totalorder %s32, 0
      %p185 = por %p183, %p184
      %p186 = scmp.ne.s32.totalorder %s178, %s180
      %p187 = scmp.eq.s32.totalorder %s37, 1
      %p188 = por %p186, %p187
      %p189 = scmp.ne.s32.totalorder %s180, %s181
      %p190 = scmp.eq.s32.totalorder %s37, 0
      %p191 = por %p189, %p190
      %p192 = scmp.ne.s32.totalorder %s180, %s181
      %p193 = scmp.eq.s32.totalorder %s38, 1
      %p194 = por %p192, %p193
      %p196 = scmp.ne.s32.totalorder %s181, %s195
      %p197 = scmp.eq.s32.totalorder %s38, 0
      %p198 = por %p196, %p197
      %s200 = sadd.s32 %s199, 1
      %p203 = scmp.eq.s32.totalorder %s32, 1
      %p204 = scmp.ne.s32.totalorder %s199, %s201
      %p205 = scmp.eq.s32.totalorder %s32, 0
      %p206 = por %p204, %p205
      %p207 = scmp.ne.s32.totalorder %s199, %s201
      %p208 = scmp.eq.s32.totalorder %s37, 1
      %p209 = por %p207, %p208
      %p210 = scmp.ne.s32.totalorder %s201, %s202
      %p211 = scmp.eq.s32.totalorder %s37, 0
      %p212 = por %p210, %p211
      %p213 = scmp.ne.s32.totalorder %s201, %s202
      %p214 = scmp.eq.s32.totalorder %s38, 1
      %p215 = por %p213, %p214
      %p217 = scmp.ne.s32.totalorder %s202, %s216
      %p218 = scmp.eq.s32.totalorder %s38, 0
      %p219 = por %p217, %p218
      %s221 = sadd.s32 %s220, 1
      %p224 = scmp.eq.s32.totalorder %s32, 1
      %p225 = scmp.ne.s32.totalorder %s220, %s222
      %p226 = scmp.eq.s32.totalorder %s32, 0
      %p227 = por %p225, %p226
      %p228 = scmp.ne.s32.totalorder %s220, %s222
      %p229 = scmp.eq.s32.totalorder %s37, 1
      %p230 = por %p228, %p229
      %p231 = scmp.ne.s32.totalorder %s222, %s223
      %p232 = scmp.eq.s32.totalorder %s37, 0
      %p233 = por %p231, %p232
      %p234 = scmp.ne.s32.totalorder %s222, %s223
      %p235 = scmp.eq.s32.totalorder %s38, 1
      %p236 = por %p234, %p235
      %p238 = scmp.ne.s32.totalorder %s223, %s237
      %p239 = scmp.eq.s32.totalorder %s38, 0
      %p240 = por %p238, %p239
      %s242 = sadd.s32 %s241, 1
      %p245 = scmp.eq.s32.totalorder %s32, 1
      %p246 = scmp.ne.s32.totalorder %s241, %s243
      %p247 = scmp.eq.s32.totalorder %s32, 0
      %p248 = por %p246, %p247
      %p249 = scmp.ne.s32.totalorder %s241, %s243
      %p250 = scmp.eq.s32.totalorder %s37, 1
      %p251 = por %p249, %p250
      %p252 = scmp.ne.s32.totalorder %s243, %s244
      %p253 = scmp.eq.s32.totalorder %s37, 0
      %p254 = por %p252, %p253
      %p255 = scmp.ne.s32.totalorder %s243, %s244
      %p256 = scmp.eq.s32.totalorder %s38, 1
      %p257 = por %p255, %p256
      %p259 = scmp.ne.s32.totalorder %s244, %s258
      %p260 = scmp.eq.s32.totalorder %s38, 0
      %p261 = por %p259, %p260
      %s262 = ssub.s32 %s39, %s51
      %s263 = ssub.s32 %s40, %s47
      %s264 = sor.u32 %s262, %s263
      %p265 = scmp.eq.s32.totalorder %s264, 0
      %s267 = sadd.s32 %s266, 1
      %s268 = scalar_select %p265, %s266, %s267
      %p271 = pneg %p265
      %p272 = scmp.eq.s32.totalorder %s32, 1
      %p273 = por %p271, %p272
      %p274 = scmp.ne.s32.totalorder %s266, %s269
      %p275 = scmp.eq.s32.totalorder %s32, 0
      %p276 = por %p274, %p275
      %p277 = scmp.ne.s32.totalorder %s266, %s269
      %p278 = scmp.eq.s32.totalorder %s37, 1
      %p279 = por %p277, %p278
      %p280 = scmp.ne.s32.totalorder %s269, %s270
      %p281 = scmp.eq.s32.totalorder %s37, 0
      %p282 = por %p280, %p281
      %p283 = scmp.ne.s32.totalorder %s269, %s270
      %p284 = scmp.eq.s32.totalorder %s38, 1
      %p285 = por %p283, %p284
      %p287 = scmp.ne.s32.totalorder %s270, %s286
      %p288 = scmp.eq.s32.totalorder %s38, 0
      %p289 = por %p287, %p288
      %s290 = ssub.s32 %s39, %s51
      %s291 = ssub.s32 %s40, %s47
      %s292 = sor.u32 %s290, %s291
      %p293 = scmp.eq.s32.totalorder %s292, 0
      %s295 = sadd.s32 %s294, 1
      %s296 = scalar_select %p293, %s294, %s295
      %p299 = pneg %p293
      %p300 = scmp.eq.s32.totalorder %s32, 1
      %p301 = por %p299, %p300
      %p302 = scmp.ne.s32.totalorder %s294, %s297
      %p303 = scmp.eq.s32.totalorder %s32, 0
      %p304 = por %p302, %p303
      %p305 = scmp.ne.s32.totalorder %s294, %s297
      %p306 = scmp.eq.s32.totalorder %s37, 1
      %p307 = por %p305, %p306
      %p308 = scmp.ne.s32.totalorder %s297, %s298
      %p309 = scmp.eq.s32.totalorder %s37, 0
      %p310 = por %p308, %p309
      %p311 = scmp.ne.s32.totalorder %s297, %s298
      %p312 = scmp.eq.s32.totalorder %s38, 1
      %p313 = por %p311, %p312
      %p315 = scmp.ne.s32.totalorder %s298, %s314
      %p316 = scmp.eq.s32.totalorder %s38, 0
      %p317 = por %p315, %p316
      %s318 = ssub.s32 %s39, %s51
      %s319 = ssub.s32 %s40, %s47
      %s320 = sor.u32 %s318, %s319
      %p321 = scmp.eq.s32.totalorder %s320, 0
      %s323 = sadd.s32 %s322, 1
      %s324 = scalar_select %p321, %s322, %s323
      %p327 = pneg %p321
      %p328 = scmp.eq.s32.totalorder %s32, 1
      %p329 = por %p327, %p328
      %p330 = scmp.ne.s32.totalorder %s322, %s325
      %p331 = scmp.eq.s32.totalorder %s32, 0
      %p332 = por %p330, %p331
      %p333 = scmp.ne.s32.totalorder %s322, %s325
      %p334 = scmp.eq.s32.totalorder %s37, 1
      %p335 = por %p333, %p334
      %p336 = scmp.ne.s32.totalorder %s325, %s326
      %p337 = scmp.eq.s32.totalorder %s37, 0
      %p338 = por %p336, %p337
      %p339 = scmp.ne.s32.totalorder %s325, %s326
      %p340 = scmp.eq.s32.totalorder %s38, 1
      %p341 = por %p339, %p340
      %p343 = scmp.ne.s32.totalorder %s326, %s342
      %p344 = scmp.eq.s32.totalorder %s38, 0
      %p345 = por %p343, %p344
      %p346 = scmp.le.s32.totalorder 1, %s32
      %p347 = scmp.lt.s32.totalorder %s32, 3
      %p348 = pnand %p346, %p347
      %p349 = pneg %p348
      // Predicated region
      $region9: #{tpu_custom_call.1} parent=5 // pred_check
        _
      $region10: #{tpu_custom_call.1} parent=5 // pred_check_branch
        %351 = sbr.rel (%p348) target = $region12
      $region11: #{tpu_custom_call.1} parent=5 // pred_region
        %s352 = ssub.s32 %s32, 1
        // Predicated region
        $region13: #{tpu_custom_call.1} parent=11 // pred_check
          %p353 = pneg %p149
        $region14: #{tpu_custom_call.1} parent=11 // pred_check_branch
          %355 = sbr.rel (%p353) target = $region16
        $region15: #{tpu_custom_call.1} parent=11 // pred_region
          %s357 = ssub.s32 256, 256
          %358 = vsyncadd [#allocation9], %s357
          %s359 = sshll.u32 [#allocation8], 4
          %s360 = int_to_ptr.vmem [resolvable:$true] %s359
          %365 = dma.hbm_to_vmem [thread:$0]  %s3, 256, %s360, [#allocation9], 64, 64, 4
        $region16: #{tpu_custom_call.1} parent=11 // pred_fallthru
          _
        // Predicated region
        $region17: #{tpu_custom_call.1} parent=11 // pred_check
          %p366 = pneg %p170
        $region18: #{tpu_custom_call.1} parent=11 // pred_check_branch
          %368 = sbr.rel (%p366) target = $region20
        $region19: #{tpu_custom_call.1} parent=11 // pred_region
          _
        $region20: #{tpu_custom_call.1} parent=11 // pred_fallthru
          _
        // Predicated region
        $region21: #{tpu_custom_call.1} parent=11 // pred_check
          %p369 = pneg %p191
        $region22: #{tpu_custom_call.1} parent=11 // pred_check_branch
          %371 = sbr.rel (%p369) target = $region24
        $region23: #{tpu_custom_call.1} parent=11 // pred_region
          %s373 = ssub.s32 256, 256
          %374 = vsyncadd [#allocation9], %s373
          %s375 = sshll.u32 [#allocation10], 4
          %s376 = int_to_ptr.vmem [resolvable:$true] %s375
          %381 = dma.hbm_to_vmem [thread:$0]  %s5, 256, %s376, [#allocation9], 64, 64, 4
        $region24: #{tpu_custom_call.1} parent=11 // pred_fallthru
          _
        // Predicated region
        $region25: #{tpu_custom_call.1} parent=11 // pred_check
          %p382 = pneg %p212
        $region26: #{tpu_custom_call.1} parent=11 // pred_check_branch
          %384 = sbr.rel (%p382) target = $region28
        $region27: #{tpu_custom_call.1} parent=11 // pred_region
          _
        $region28: #{tpu_custom_call.1} parent=11 // pred_fallthru
          _
        // Predicated region
        $region29: #{tpu_custom_call.1} parent=11 // pred_check
          %p385 = pneg %p233
        $region30: #{tpu_custom_call.1} parent=11 // pred_check_branch
          %387 = sbr.rel (%p385) target = $region32
        $region31: #{tpu_custom_call.1} parent=11 // pred_region
          %s389 = ssub.s32 256, 256
          %390 = vsyncadd [#allocation12], %s389
          %s391 = sshll.u32 [#allocation11], 4
          %s392 = int_to_ptr.vmem [resolvable:$true] %s391
          %397 = dma.hbm_to_vmem [thread:$0]  %s7, 256, %s392, [#allocation12], 64, 64, 4
        $region32: #{tpu_custom_call.1} parent=11 // pred_fallthru
          _
        // Predicated region
        $region33: #{tpu_custom_call.1} parent=11 // pred_check
          %p398 = pneg %p254
        $region34: #{tpu_custom_call.1} parent=11 // pred_check_branch
          %400 = sbr.rel (%p398) target = $region36
        $region35: #{tpu_custom_call.1} parent=11 // pred_region
          _
        $region36: #{tpu_custom_call.1} parent=11 // pred_fallthru
          _
      $region12: #{tpu_custom_call.1} parent=5 // pred_fallthru
        _
      %p401 = scmp.lt.s32.totalorder %s32, 2
      // Predicated region
      $region37: #{tpu_custom_call.1} parent=5 // pred_check
        %p402 = pneg %p401
      $region38: #{tpu_custom_call.1} parent=5 // pred_check_branch
        %404 = sbr.rel (%p402) target = $region40
      $region39: #{tpu_custom_call.1} parent=5 // pred_region
        // Predicated region
        $region41: #{tpu_custom_call.1} parent=39 // pred_check
          %p405 = pneg %p66
        $region42: #{tpu_custom_call.1} parent=39 // pred_check_branch
          %407 = sbr.rel (%p405) target = $region44
        $region43: #{tpu_custom_call.1} parent=39 // pred_region
          %s408 = sand.u32 %s56, 1
          %s409 = scalar_lea.sflag [#allocation3], %s408
          %s410 = sand.u32 %s56, 1
          %s411 = smul.addr %s410, 8
          %s412 = scalar_lea.vmem [#allocation2], %s411
          %s414 = ssub.s32 128, 128
          %415 = vsyncadd %s409, %s414
          %s416 = sadd.s32 %s40, %s39
          %s417 = smul.addr %s416, 128
          %s418 = scalar_lea.hbm %s0, %s417
          %s420 = sshll.u32 %s412, 4
          %s421 = int_to_ptr.vmem [resolvable:$true] %s420
          %423 = dma.hbm_to_vmem [thread:$0]  %s418, 128, %s421, %s409
        $region44: #{tpu_custom_call.1} parent=39 // pred_fallthru
          _
        // Predicated region
        $region45: #{tpu_custom_call.1} parent=39 // pred_check
          %p424 = pneg %p94
        $region46: #{tpu_custom_call.1} parent=39 // pred_check_branch
          %426 = sbr.rel (%p424) target = $region48
        $region47: #{tpu_custom_call.1} parent=39 // pred_region
          %s427 = sand.u32 %s32, 1
          %s428 = scalar_lea.sflag [#allocation6], %s427
          %s429 = sand.u32 %s84, 1
          %s430 = smul.addr %s429, 8
          %s431 = scalar_lea.vmem [#allocation5], %s430
          %s433 = ssub.s32 128, 128
          %434 = vsyncadd %s428, %s433
          %s435 = sadd.s32 %s40, %s39
          %s436 = smul.addr %s435, 128
          %s437 = scalar_lea.hbm %s1, %s436
          %s439 = sshll.u32 %s431, 4
          %s440 = int_to_ptr.vmem [resolvable:$true] %s439
          %442 = dma.hbm_to_vmem [thread:$0]  %s437, 128, %s440, %s428
        $region48: #{tpu_custom_call.1} parent=39 // pred_fallthru
          _
        // Predicated region
        $region49: #{tpu_custom_call.1} parent=39 // pred_check
          %p443 = pneg %p122
        $region50: #{tpu_custom_call.1} parent=39 // pred_check_branch
          %445 = sbr.rel (%p443) target = $region52
        $region51: #{tpu_custom_call.1} parent=39 // pred_region
          %s446 = sand.u32 %s32, 1
          %s447 = scalar_lea.sflag [#allocation6], %s446
          %s448 = sand.u32 %s112, 1
          %s449 = smul.addr %s448, 8
          %s450 = scalar_lea.vmem [#allocation7], %s449
          %s452 = ssub.s32 128, 128
          %453 = vsyncadd %s447, %s452
          %s454 = sadd.s32 %s40, %s39
          %s455 = smul.addr %s454, 128
          %s456 = scalar_lea.hbm %s2, %s455
          %s458 = sshll.u32 %s450, 4
          %s459 = int_to_ptr.vmem [resolvable:$true] %s458
          %461 = dma.hbm_to_vmem [thread:$0]  %s456, 128, %s459, %s447
        $region52: #{tpu_custom_call.1} parent=39 // pred_fallthru
          _
      $region40: #{tpu_custom_call.1} parent=5 // pred_fallthru
        _
      %p462 = scmp.le.s32.totalorder 1, %s32
      %p463 = scmp.lt.s32.totalorder %s32, 3
      %p464 = pnand %p462, %p463
      %p465 = pneg %p464
      // Predicated region
      $region53: #{tpu_custom_call.1} parent=5 // pred_check
        _
      $region54: #{tpu_custom_call.1} parent=5 // pred_check_branch
        %467 = sbr.rel (%p464) target = $region56
      $region55: #{tpu_custom_call.1} parent=5 // pred_region
        %s468 = ssub.s32 %s32, 1
        %s469 = sand.u32 %s59, 1
        %s470 = scalar_lea.sflag [#allocation3], %s469
        %s471 = sand.u32 %s59, 1
        %s472 = smul.addr %s471, 8
        %s473 = scalar_lea.vmem [#allocation2], %s472
        // Predicated region
        $region57: #{tpu_custom_call.1} parent=55 // pred_check
          %p474 = pneg %p72
        $region58: #{tpu_custom_call.1} parent=55 // pred_check_branch
          %476 = sbr.rel (%p474) target = $region60
        $region59: #{tpu_custom_call.1} parent=55 // pred_region
          %477 = dma.done %s470, 128
        $region60: #{tpu_custom_call.1} parent=55 // pred_fallthru
          _
        %s478 = sand.u32 %s37, 1
        %s479 = scalar_lea.sflag [#allocation6], %s478
        %s480 = sand.u32 %s87, 1
        %s481 = smul.addr %s480, 8
        %s482 = scalar_lea.vmem [#allocation5], %s481
        // Predicated region
        $region61: #{tpu_custom_call.1} parent=55 // pred_check
          %p483 = pneg %p100
        $region62: #{tpu_custom_call.1} parent=55 // pred_check_branch
          %485 = sbr.rel (%p483) target = $region64
        $region63: #{tpu_custom_call.1} parent=55 // pred_region
          %486 = dma.done %s479, 128
        $region64: #{tpu_custom_call.1} parent=55 // pred_fallthru
          _
        %s487 = sand.u32 %s37, 1
        %s488 = scalar_lea.sflag [#allocation6], %s487
        %s489 = sand.u32 %s115, 1
        %s490 = smul.addr %s489, 8
        %s491 = scalar_lea.vmem [#allocation7], %s490
        // Predicated region
        $region65: #{tpu_custom_call.1} parent=55 // pred_check
          %p492 = pneg %p128
        $region66: #{tpu_custom_call.1} parent=55 // pred_check_branch
          %494 = sbr.rel (%p492) target = $region68
        $region67: #{tpu_custom_call.1} parent=55 // pred_region
          %495 = dma.done %s488, 128
        $region68: #{tpu_custom_call.1} parent=55 // pred_fallthru
          _
        // Predicated region
        $region69: #{tpu_custom_call.1} parent=55 // pred_check
          %p496 = pneg %p149
        $region70: #{tpu_custom_call.1} parent=55 // pred_check_branch
          %498 = sbr.rel (%p496) target = $region72
        $region71: #{tpu_custom_call.1} parent=55 // pred_region
          %499 = dma.done [#allocation9], 256
        $region72: #{tpu_custom_call.1} parent=55 // pred_fallthru
          _
        // Predicated region
        $region73: #{tpu_custom_call.1} parent=55 // pred_check
          %p500 = pneg %p191
        $region74: #{tpu_custom_call.1} parent=55 // pred_check_branch
          %502 = sbr.rel (%p500) target = $region76
        $region75: #{tpu_custom_call.1} parent=55 // pred_region
          %503 = dma.done [#allocation9], 256
        $region76: #{tpu_custom_call.1} parent=55 // pred_fallthru
          _
        // Predicated region
        $region77: #{tpu_custom_call.1} parent=55 // pred_check
          %p504 = pneg %p233
        $region78: #{tpu_custom_call.1} parent=55 // pred_check_branch
          %506 = sbr.rel (%p504) target = $region80
        $region79: #{tpu_custom_call.1} parent=55 // pred_region
          %507 = dma.done [#allocation12], 256
        $region80: #{tpu_custom_call.1} parent=55 // pred_fallthru
          _
        %s508 = sand.u32 %s59, 1
        %s509 = scalar_lea.sflag [#allocation3], %s508
        %s510 = sand.u32 %s59, 1
        %s511 = smul.addr %s510, 8
        %s512 = scalar_lea.vmem [#allocation2], %s511
        %p513 = pneg %p72
        %p514 = pneg %p69
        %s515 = sand.u32 %s37, 1
        %s516 = scalar_lea.sflag [#allocation6], %s515
        %s517 = sand.u32 %s87, 1
        %s518 = smul.addr %s517, 8
        %s519 = scalar_lea.vmem [#allocation5], %s518
        %p520 = pneg %p100
        %p521 = pneg %p97
        %s522 = sand.u32 %s37, 1
        %s523 = scalar_lea.sflag [#allocation6], %s522
        %s524 = sand.u32 %s115, 1
        %s525 = smul.addr %s524, 8
        %s526 = scalar_lea.vmem [#allocation7], %s525
        %p527 = pneg %p128
        %p528 = pneg %p125
        %p529 = pneg %p149
        %p530 = pneg %p146
        %p531 = pneg %p170
        %p532 = pneg %p167
        %p533 = pneg %p191
        %p534 = pneg %p188
        %p535 = pneg %p212
        %p536 = pneg %p209
        %p537 = pneg %p233
        %p538 = pneg %p230
        %p539 = pneg %p254
        %p540 = pneg %p251
        %p541 = pneg %p282
        %p542 = pneg %p279
        %s543 = sand.u32 %s269, 1
        %s544 = scalar_lea.sflag [#allocation4], %s543
        %s545 = sand.u32 %s269, 1
        %s546 = smul.addr %s545, 16
        %s547 = scalar_lea.vmem [#allocation13], %s546
        %p548 = pneg %p310
        %p549 = pneg %p307
        %s550 = sand.u32 %s37, 1
        %s551 = scalar_lea.sflag [#allocation15], %s550
        %s552 = sand.u32 %s297, 1
        %s553 = smul.addr %s552, 16
        %s554 = scalar_lea.vmem [#allocation14], %s553
        %p555 = pneg %p338
        %p556 = pneg %p335
        %s557 = sand.u32 %s37, 1
        %s558 = scalar_lea.sflag [#allocation15], %s557
        %s559 = sand.u32 %s325, 1
        %s560 = smul.addr %s559, 16
        %s561 = scalar_lea.vmem [#allocation16], %s560
        %v563 = vld [vmem:[%s473] sm:$0xff]
        %v564 = vpack.c.bf16 %v563, %v563
        %v565 = vld [vmem:[#allocation8] sm:$0xf]
        %v566 = vld [vmem:[#allocation8 + $0x4] sm:$0xf]
        %v567 = vld [vmem:[#allocation8 + $0x8] sm:$0xf]
        %v568 = vld [vmem:[#allocation8 + $0xc] sm:$0xf]
        %v569 = vld [vmem:[%s4] sm:$0x1]
        %v571 = vlaneseq
        %v572 = vshrl.u32 %v571, 7
        %v573 = vsub.s32 0, %v572
        %v574 = vrot.slane %v569, %v573
        %v580 = vunpack.c.l.b16 %v565
        %v581 = vunpack.c.l.b16 %v566
        %v582 = vunpack.c.l.b16 %v567
        %v583 = vunpack.c.l.b16 %v568
        %v584 = vpack.c.b16 %v581, %v580
        %v585 = vpack.c.b16 %v583, %v582
        %vm588 = vcmask 261120
        %v590 = vsel %vm588, %v564, 0
        %592 = vmatprep.subr.bf16.mxu0 0
        %593 = vmatpush1.bf16.msra.mxu0 0
        %594 = vmatprep.subr.bf16.mxu0 0
        %595 = vmatpush1.bf16.msra.mxu0 0
        %596 = vmatprep.subr.bf16.mxu0 0
        %597 = vmatpush1.bf16.msra.mxu0 0
        %598 = vmatprep.subr.bf16.mxu0 0
        %599 = vmatpush1.bf16.msra.mxu0 0
        %600 = vmatprep.subr.bf16.mxu0 0
        %601 = vmatpush1.bf16.msra.mxu0 0
        %602 = vmatprep.subr.bf16.mxu0 0
        %603 = vmatpush1.bf16.msra.mxu0 0
        %604 = vmatprep.subr.bf16.mxu0 0
        %605 = vmatpush1.bf16.msra.mxu0 %v585
        %606 = vmatprep.subr.bf16.mxu0 0
        %607 = vmatpush1.bf16.msra.mxu0 %v584
        %608 = vmatprep.subr.bf16.mxu0 0
        %609 = vmatpush2.bf16.msra.mxu0 0
        %610 = vmatprep.subr.bf16.mxu0 0
        %611 = vmatpush2.bf16.msra.mxu0 0
        %612 = vmatprep.subr.bf16.mxu0 0
        %613 = vmatpush2.bf16.msra.mxu0 0
        %614 = vmatprep.subr.bf16.mxu0 0
        %615 = vmatpush2.bf16.msra.mxu0 0
        %616 = vmatprep.subr.bf16.mxu0 0
        %617 = vmatpush2.bf16.msra.mxu0 0
        %618 = vmatprep.subr.bf16.mxu0 0
        %619 = vmatpush2.bf16.msra.mxu0 0
        %620 = vmatprep.subr.bf16.mxu0 0
        %621 = vmatpush2.bf16.msra.mxu0 0
        %622 = vmatprep.subr.bf16.mxu0 0
        %623 = vmatpush2.bf16.msra.mxu0 0
        %624 = vmatprep.mubr.bf16.mxu0 0
        %625 = vmatmul.mubr.bf16.gmra.mxu0 %v590
        %v626 = vpop.f32.mrf.mxu0
        %v627 = vadd.f32 %v574, %v626
        %v628 = vpop.f32.mrf.mxu0
        %v629 = vpop.f32.mrf.mxu0
        %v630 = vpop.f32.mrf.mxu0
        %631 = vdwg.mxu0
        %633 = vrot.lane.b32.xlu0 %v627, 120
        %v634 = vpop.permute.xlu0 %633
        %636 = vrot.lane.b32.xlu0 %v627, 112
        %v637 = vpop.permute.xlu0 %636
        %639 = vrot.lane.b32.xlu0 %v627, 104
        %v640 = vpop.permute.xlu0 %639
        %v642 = vcombine.low %v627, %v637
        %v643 = vcombine.high %v627, %v637
        %v645 = vunpack.c.l.s4 1983009808
        %v646 = vunpack.c.0.s8 %v645
        %v647 = vlaneseq
        %v648 = vshrl.u32 %v647, 7
        %v649 = vsub.s32 %v646, %v648
        %v650 = vrot.slane %v642, %v649
        %v652 = vunpack.c.l.s4 1983009808
        %v653 = vunpack.c.0.s8 %v652
        %v654 = vlaneseq
        %v655 = vshrl.u32 %v654, 7
        %v656 = vsub.s32 %v653, %v655
        %v657 = vrot.slane %v643, %v656
        %v658 = vcombine.low %v634, %v640
        %v659 = vcombine.high %v634, %v640
        %v661 = vunpack.c.l.s4 1983009808
        %v662 = vunpack.c.0.s8 %v661
        %v663 = vlaneseq
        %v664 = vshrl.u32 %v663, 7
        %v665 = vsub.s32 %v662, %v664
        %v666 = vrot.slane %v658, %v665
        %v668 = vunpack.c.l.s4 1983009808
        %v669 = vunpack.c.0.s8 %v668
        %v670 = vlaneseq
        %v671 = vshrl.u32 %v670, 7
        %v672 = vsub.s32 %v669, %v671
        %v673 = vrot.slane %v659, %v672
        %v674 = vcombine.low %v650, %v666
        %v675 = vcombine.high %v650, %v666
        %v677 = vunpack.c.l.s4 1934713408
        %v678 = vunpack.c.0.s8 %v677
        %v679 = vlaneseq
        %v680 = vshrl.u32 %v679, 7
        %v681 = vsub.s32 %v678, %v680
        %v682 = vrot.slane %v674, %v681
        %v684 = vunpack.c.l.s4 1934713408
        %v685 = vunpack.c.0.s8 %v684
        %v686 = vlaneseq
        %v687 = vshrl.u32 %v686, 7
        %v688 = vsub.s32 %v685, %v687
        %v689 = vrot.slane %v675, %v688
        %v690 = vcombine.low %v657, %v673
        %v691 = vcombine.high %v657, %v673
        %v693 = vunpack.c.l.s4 1934713408
        %v694 = vunpack.c.0.s8 %v693
        %v695 = vlaneseq
        %v696 = vshrl.u32 %v695, 7
        %v697 = vsub.s32 %v694, %v696
        %v698 = vrot.slane %v690, %v697
        %v700 = vunpack.c.l.s4 1934713408
        %v701 = vunpack.c.0.s8 %v700
        %v702 = vlaneseq
        %v703 = vshrl.u32 %v702, 7
        %v704 = vsub.s32 %v701, %v703
        %v705 = vrot.slane %v691, %v704
        %v706 = vcombine.high %v682, 0.0
        %v707 = vcombine.high %v689, 0.0
        %v708 = vcombine.high %v698, 0.0
        %v709 = vcombine.high %v705, 0.0
        %v710 = vcombine.low %v682, %v689
        %v712 = vunpack.c.l.s4 1983009808
        %v713 = vunpack.c.0.s8 %v712
        %v714 = vlaneseq
        %v715 = vshrl.u32 %v714, 7
        %v716 = vsub.s32 %v713, %v715
        %v717 = vrot.slane %v710, %v716
        %v718 = vcombine.low %v706, %v707
        %v720 = vunpack.c.l.s4 1983009808
        %v721 = vunpack.c.0.s8 %v720
        %v722 = vlaneseq
        %v723 = vshrl.u32 %v722, 7
        %v724 = vsub.s32 %v721, %v723
        %v725 = vrot.slane %v718, %v724
        %v726 = vcombine.low %v698, %v705
        %v728 = vunpack.c.l.s4 1983009808
        %v729 = vunpack.c.0.s8 %v728
        %v730 = vlaneseq
        %v731 = vshrl.u32 %v730, 7
        %v732 = vsub.s32 %v729, %v731
        %v733 = vrot.slane %v726, %v732
        %v734 = vcombine.low %v708, %v709
        %v736 = vunpack.c.l.s4 1983009808
        %v737 = vunpack.c.0.s8 %v736
        %v738 = vlaneseq
        %v739 = vshrl.u32 %v738, 7
        %v740 = vsub.s32 %v737, %v739
        %v741 = vrot.slane %v734, %v740
        %v742 = vcombine.low %v717, %v725
        %v743 = vcombine.high %v717, %v725
        %v745 = vunpack.c.l.s4 1934713408
        %v746 = vunpack.c.0.s8 %v745
        %v747 = vlaneseq
        %v748 = vshrl.u32 %v747, 7
        %v749 = vsub.s32 %v746, %v748
        %v750 = vrot.slane %v742, %v749
        %v752 = vunpack.c.l.s4 1934713408
        %v753 = vunpack.c.0.s8 %v752
        %v754 = vlaneseq
        %v755 = vshrl.u32 %v754, 7
        %v756 = vsub.s32 %v753, %v755
        %v757 = vrot.slane %v743, %v756
        %v758 = vcombine.low %v733, %v741
        %v759 = vcombine.high %v733, %v741
        %v761 = vunpack.c.l.s4 1934713408
        %v762 = vunpack.c.0.s8 %v761
        %v763 = vlaneseq
        %v764 = vshrl.u32 %v763, 7
        %v765 = vsub.s32 %v762, %v764
        %v766 = vrot.slane %v758, %v765
        %v768 = vunpack.c.l.s4 1934713408
        %v769 = vunpack.c.0.s8 %v768
        %v770 = vlaneseq
        %v771 = vshrl.u32 %v770, 7
        %v772 = vsub.s32 %v769, %v771
        %v773 = vrot.slane %v759, %v772
        %v774 = vcombine.low %v750, %v766
        %v775 = vcombine.high %v750, %v766
        %v776 = vcombine.low %v757, %v773
        %v777 = vcombine.high %v757, %v773
        %v778 = vpack.c.bf16 %v774, %v774
        %v779 = vpack.c.bf16 %v775, %v775
        %v780 = vpack.c.bf16 %v776, %v776
        %v781 = vpack.c.bf16 %v777, %v777
        %vm782 = vcmask 60416
        %783 = vst.msk [vmem:[%s547] sm:$0xf] %vm782, %v778
        %784 = vst.msk [vmem:[%s547 + $0x4] sm:$0xf] %vm782, %v779
        %785 = vst.msk [vmem:[%s547 + $0x8] sm:$0xf] %vm782, %v780
        %786 = vst.msk [vmem:[%s547 + $0xc] sm:$0xf] %vm782, %v781
        %v787 = vld [vmem:[%s482] sm:$0xff]
        %v788 = vpack.c.bf16 %v787, %v787
        %v789 = vld [vmem:[#allocation10] sm:$0xf]
        %v790 = vld [vmem:[#allocation10 + $0x4] sm:$0xf]
        %v791 = vld [vmem:[#allocation10 + $0x8] sm:$0xf]
        %v792 = vld [vmem:[#allocation10 + $0xc] sm:$0xf]
        %v793 = vld [vmem:[%s6] sm:$0x1]
        %v795 = vlaneseq
        %v796 = vshrl.u32 %v795, 7
        %v797 = vsub.s32 0, %v796
        %v798 = vrot.slane %v793, %v797
        %v804 = vunpack.c.l.b16 %v789
        %v805 = vunpack.c.l.b16 %v790
        %v806 = vunpack.c.l.b16 %v791
        %v807 = vunpack.c.l.b16 %v792
        %v808 = vpack.c.b16 %v805, %v804
        %v809 = vpack.c.b16 %v807, %v806
        %v813 = vsel %vm588, %v788, 0
        %815 = vmatprep.subr.bf16.mxu0 0
        %816 = vmatpush1.bf16.msra.mxu0 0
        %817 = vmatprep.subr.bf16.mxu0 0
        %818 = vmatpush1.bf16.msra.mxu0 0
        %819 = vmatprep.subr.bf16.mxu0 0
        %820 = vmatpush1.bf16.msra.mxu0 0
        %821 = vmatprep.subr.bf16.mxu0 0
        %822 = vmatpush1.bf16.msra.mxu0 0
        %823 = vmatprep.subr.bf16.mxu0 0
        %824 = vmatpush1.bf16.msra.mxu0 0
        %825 = vmatprep.subr.bf16.mxu0 0
        %826 = vmatpush1.bf16.msra.mxu0 0
        %827 = vmatprep.subr.bf16.mxu0 0
        %828 = vmatpush1.bf16.msra.mxu0 %v809
        %829 = vmatprep.subr.bf16.mxu0 0
        %830 = vmatpush1.bf16.msra.mxu0 %v808
        %831 = vmatprep.subr.bf16.mxu0 0
        %832 = vmatpush2.bf16.msra.mxu0 0
        %833 = vmatprep.subr.bf16.mxu0 0
        %834 = vmatpush2.bf16.msra.mxu0 0
        %835 = vmatprep.subr.bf16.mxu0 0
        %836 = vmatpush2.bf16.msra.mxu0 0
        %837 = vmatprep.subr.bf16.mxu0 0
        %838 = vmatpush2.bf16.msra.mxu0 0
        %839 = vmatprep.subr.bf16.mxu0 0
        %840 = vmatpush2.bf16.msra.mxu0 0
        %841 = vmatprep.subr.bf16.mxu0 0
        %842 = vmatpush2.bf16.msra.mxu0 0
        %843 = vmatprep.subr.bf16.mxu0 0
        %844 = vmatpush2.bf16.msra.mxu0 0
        %845 = vmatprep.subr.bf16.mxu0 0
        %846 = vmatpush2.bf16.msra.mxu0 0
        %847 = vmatprep.mubr.bf16.mxu0 0
        %848 = vmatmul.mubr.bf16.gmra.mxu0 %v813
        %v849 = vpop.f32.mrf.mxu0
        %v850 = vadd.f32 %v798, %v849
        %v851 = vpop.f32.mrf.mxu0
        %v852 = vpop.f32.mrf.mxu0
        %v853 = vpop.f32.mrf.mxu0
        %854 = vdwg.mxu0
        %856 = vrot.lane.b32.xlu0 %v850, 120
        %v857 = vpop.permute.xlu0 %856
        %859 = vrot.lane.b32.xlu0 %v850, 112
        %v860 = vpop.permute.xlu0 %859
        %862 = vrot.lane.b32.xlu0 %v850, 104
        %v863 = vpop.permute.xlu0 %862
        %v865 = vcombine.low %v850, %v860
        %v866 = vcombine.high %v850, %v860
        %v868 = vunpack.c.l.s4 1983009808
        %v869 = vunpack.c.0.s8 %v868
        %v870 = vlaneseq
        %v871 = vshrl.u32 %v870, 7
        %v872 = vsub.s32 %v869, %v871
        %v873 = vrot.slane %v865, %v872
        %v875 = vunpack.c.l.s4 1983009808
        %v876 = vunpack.c.0.s8 %v875
        %v877 = vlaneseq
        %v878 = vshrl.u32 %v877, 7
        %v879 = vsub.s32 %v876, %v878
        %v880 = vrot.slane %v866, %v879
        %v881 = vcombine.low %v857, %v863
        %v882 = vcombine.high %v857, %v863
        %v884 = vunpack.c.l.s4 1983009808
        %v885 = vunpack.c.0.s8 %v884
        %v886 = vlaneseq
        %v887 = vshrl.u32 %v886, 7
        %v888 = vsub.s32 %v885, %v887
        %v889 = vrot.slane %v881, %v888
        %v891 = vunpack.c.l.s4 1983009808
        %v892 = vunpack.c.0.s8 %v891
        %v893 = vlaneseq
        %v894 = vshrl.u32 %v893, 7
        %v895 = vsub.s32 %v892, %v894
        %v896 = vrot.slane %v882, %v895
        %v897 = vcombine.low %v873, %v889
        %v898 = vcombine.high %v873, %v889
        %v900 = vunpack.c.l.s4 1934713408
        %v901 = vunpack.c.0.s8 %v900
        %v902 = vlaneseq
        %v903 = vshrl.u32 %v902, 7
        %v904 = vsub.s32 %v901, %v903
        %v905 = vrot.slane %v897, %v904
        %v907 = vunpack.c.l.s4 1934713408
        %v908 = vunpack.c.0.s8 %v907
        %v909 = vlaneseq
        %v910 = vshrl.u32 %v909, 7
        %v911 = vsub.s32 %v908, %v910
        %v912 = vrot.slane %v898, %v911
        %v913 = vcombine.low %v880, %v896
        %v914 = vcombine.high %v880, %v896
        %v916 = vunpack.c.l.s4 1934713408
        %v917 = vunpack.c.0.s8 %v916
        %v918 = vlaneseq
        %v919 = vshrl.u32 %v918, 7
        %v920 = vsub.s32 %v917, %v919
        %v921 = vrot.slane %v913, %v920
        %v923 = vunpack.c.l.s4 1934713408
        %v924 = vunpack.c.0.s8 %v923
        %v925 = vlaneseq
        %v926 = vshrl.u32 %v925, 7
        %v927 = vsub.s32 %v924, %v926
        %v928 = vrot.slane %v914, %v927
        %v929 = vcombine.high %v905, 0.0
        %v930 = vcombine.high %v912, 0.0
        %v931 = vcombine.high %v921, 0.0
        %v932 = vcombine.high %v928, 0.0
        %v933 = vcombine.low %v905, %v912
        %v935 = vunpack.c.l.s4 1983009808
        %v936 = vunpack.c.0.s8 %v935
        %v937 = vlaneseq
        %v938 = vshrl.u32 %v937, 7
        %v939 = vsub.s32 %v936, %v938
        %v940 = vrot.slane %v933, %v939
        %v941 = vcombine.low %v929, %v930
        %v943 = vunpack.c.l.s4 1983009808
        %v944 = vunpack.c.0.s8 %v943
        %v945 = vlaneseq
        %v946 = vshrl.u32 %v945, 7
        %v947 = vsub.s32 %v944, %v946
        %v948 = vrot.slane %v941, %v947
        %v949 = vcombine.low %v921, %v928
        %v951 = vunpack.c.l.s4 1983009808
        %v952 = vunpack.c.0.s8 %v951
        %v953 = vlaneseq
        %v954 = vshrl.u32 %v953, 7
        %v955 = vsub.s32 %v952, %v954
        %v956 = vrot.slane %v949, %v955
        %v957 = vcombine.low %v931, %v932
        %v959 = vunpack.c.l.s4 1983009808
        %v960 = vunpack.c.0.s8 %v959
        %v961 = vlaneseq
        %v962 = vshrl.u32 %v961, 7
        %v963 = vsub.s32 %v960, %v962
        %v964 = vrot.slane %v957, %v963
        %v965 = vcombine.low %v940, %v948
        %v966 = vcombine.high %v940, %v948
        %v968 = vunpack.c.l.s4 1934713408
        %v969 = vunpack.c.0.s8 %v968
        %v970 = vlaneseq
        %v971 = vshrl.u32 %v970, 7
        %v972 = vsub.s32 %v969, %v971
        %v973 = vrot.slane %v965, %v972
        %v975 = vunpack.c.l.s4 1934713408
        %v976 = vunpack.c.0.s8 %v975
        %v977 = vlaneseq
        %v978 = vshrl.u32 %v977, 7
        %v979 = vsub.s32 %v976, %v978
        %v980 = vrot.slane %v966, %v979
        %v981 = vcombine.low %v956, %v964
        %v982 = vcombine.high %v956, %v964
        %v984 = vunpack.c.l.s4 1934713408
        %v985 = vunpack.c.0.s8 %v984
        %v986 = vlaneseq
        %v987 = vshrl.u32 %v986, 7
        %v988 = vsub.s32 %v985, %v987
        %v989 = vrot.slane %v981, %v988
        %v991 = vunpack.c.l.s4 1934713408
        %v992 = vunpack.c.0.s8 %v991
        %v993 = vlaneseq
        %v994 = vshrl.u32 %v993, 7
        %v995 = vsub.s32 %v992, %v994
        %v996 = vrot.slane %v982, %v995
        %v997 = vcombine.low %v973, %v989
        %v998 = vcombine.high %v973, %v989
        %v999 = vcombine.low %v980, %v996
        %v1000 = vcombine.high %v980, %v996
        %v1001 = vpack.c.bf16 %v997, %v997
        %v1002 = vpack.c.bf16 %v998, %v998
        %v1003 = vpack.c.bf16 %v999, %v999
        %v1004 = vpack.c.bf16 %v1000, %v1000
        %1005 = vst.msk [vmem:[%s554] sm:$0xf] %vm782, %v1001
        %1006 = vst.msk [vmem:[%s554 + $0x4] sm:$0xf] %vm782, %v1002
        %1007 = vst.msk [vmem:[%s554 + $0x8] sm:$0xf] %vm782, %v1003
        %1008 = vst.msk [vmem:[%s554 + $0xc] sm:$0xf] %vm782, %v1004
        %v1009 = vld [vmem:[%s491] sm:$0xff]
        %v1010 = vpack.c.bf16 %v1009, %v1009
        %v1011 = vld [vmem:[#allocation11] sm:$0xf]
        %v1012 = vld [vmem:[#allocation11 + $0x4] sm:$0xf]
        %v1013 = vld [vmem:[#allocation11 + $0x8] sm:$0xf]
        %v1014 = vld [vmem:[#allocation11 + $0xc] sm:$0xf]
        %v1015 = vld [vmem:[%s8] sm:$0x1]
        %v1017 = vlaneseq
        %v1018 = vshrl.u32 %v1017, 7
        %v1019 = vsub.s32 0, %v1018
        %v1020 = vrot.slane %v1015, %v1019
        %v1026 = vunpack.c.l.b16 %v1011
        %v1027 = vunpack.c.l.b16 %v1012
        %v1028 = vunpack.c.l.b16 %v1013
        %v1029 = vunpack.c.l.b16 %v1014
        %v1030 = vpack.c.b16 %v1027, %v1026
        %v1031 = vpack.c.b16 %v1029, %v1028
        %v1035 = vsel %vm588, %v1010, 0
        %1037 = vmatprep.subr.bf16.mxu0 0
        %1038 = vmatpush1.bf16.msra.mxu0 0
        %1039 = vmatprep.subr.bf16.mxu0 0
        %1040 = vmatpush1.bf16.msra.mxu0 0
        %1041 = vmatprep.subr.bf16.mxu0 0
        %1042 = vmatpush1.bf16.msra.mxu0 0
        %1043 = vmatprep.subr.bf16.mxu0 0
        %1044 = vmatpush1.bf16.msra.mxu0 0
        %1045 = vmatprep.subr.bf16.mxu0 0
        %1046 = vmatpush1.bf16.msra.mxu0 0
        %1047 = vmatprep.subr.bf16.mxu0 0
        %1048 = vmatpush1.bf16.msra.mxu0 0
        %1049 = vmatprep.subr.bf16.mxu0 0
        %1050 = vmatpush1.bf16.msra.mxu0 %v1031
        %1051 = vmatprep.subr.bf16.mxu0 0
        %1052 = vmatpush1.bf16.msra.mxu0 %v1030
        %1053 = vmatprep.subr.bf16.mxu0 0
        %1054 = vmatpush2.bf16.msra.mxu0 0
        %1055 = vmatprep.subr.bf16.mxu0 0
        %1056 = vmatpush2.bf16.msra.mxu0 0
        %1057 = vmatprep.subr.bf16.mxu0 0
        %1058 = vmatpush2.bf16.msra.mxu0 0
        %1059 = vmatprep.subr.bf16.mxu0 0
        %1060 = vmatpush2.bf16.msra.mxu0 0
        %1061 = vmatprep.subr.bf16.mxu0 0
        %1062 = vmatpush2.bf16.msra.mxu0 0
        %1063 = vmatprep.subr.bf16.mxu0 0
        %1064 = vmatpush2.bf16.msra.mxu0 0
        %1065 = vmatprep.subr.bf16.mxu0 0
        %1066 = vmatpush2.bf16.msra.mxu0 0
        %1067 = vmatprep.subr.bf16.mxu0 0
        %1068 = vmatpush2.bf16.msra.mxu0 0
        %1069 = vmatprep.mubr.bf16.mxu0 0
        %1070 = vmatmul.mubr.bf16.gmra.mxu0 %v1035
        %v1071 = vpop.f32.mrf.mxu0
        %v1072 = vadd.f32 %v1020, %v1071
        %v1073 = vpop.f32.mrf.mxu0
        %v1074 = vpop.f32.mrf.mxu0
        %v1075 = vpop.f32.mrf.mxu0
        %1076 = vdwg.mxu0
        %1078 = vrot.lane.b32.xlu0 %v1072, 120
        %v1079 = vpop.permute.xlu0 %1078
        %1081 = vrot.lane.b32.xlu0 %v1072, 112
        %v1082 = vpop.permute.xlu0 %1081
        %1084 = vrot.lane.b32.xlu0 %v1072, 104
        %v1085 = vpop.permute.xlu0 %1084
        %v1087 = vcombine.low %v1072, %v1082
        %v1088 = vcombine.high %v1072, %v1082
        %v1090 = vunpack.c.l.s4 1983009808
        %v1091 = vunpack.c.0.s8 %v1090
        %v1092 = vlaneseq
        %v1093 = vshrl.u32 %v1092, 7
        %v1094 = vsub.s32 %v1091, %v1093
        %v1095 = vrot.slane %v1087, %v1094
        %v1097 = vunpack.c.l.s4 1983009808
        %v1098 = vunpack.c.0.s8 %v1097
        %v1099 = vlaneseq
        %v1100 = vshrl.u32 %v1099, 7
        %v1101 = vsub.s32 %v1098, %v1100
        %v1102 = vrot.slane %v1088, %v1101
        %v1103 = vcombine.low %v1079, %v1085
        %v1104 = vcombine.high %v1079, %v1085
        %v1106 = vunpack.c.l.s4 1983009808
        %v1107 = vunpack.c.0.s8 %v1106
        %v1108 = vlaneseq
        %v1109 = vshrl.u32 %v1108, 7
        %v1110 = vsub.s32 %v1107, %v1109
        %v1111 = vrot.slane %v1103, %v1110
        %v1113 = vunpack.c.l.s4 1983009808
        %v1114 = vunpack.c.0.s8 %v1113
        %v1115 = vlaneseq
        %v1116 = vshrl.u32 %v1115, 7
        %v1117 = vsub.s32 %v1114, %v1116
        %v1118 = vrot.slane %v1104, %v1117
        %v1119 = vcombine.low %v1095, %v1111
        %v1120 = vcombine.high %v1095, %v1111
        %v1122 = vunpack.c.l.s4 1934713408
        %v1123 = vunpack.c.0.s8 %v1122
        %v1124 = vlaneseq
        %v1125 = vshrl.u32 %v1124, 7
        %v1126 = vsub.s32 %v1123, %v1125
        %v1127 = vrot.slane %v1119, %v1126
        %v1129 = vunpack.c.l.s4 1934713408
        %v1130 = vunpack.c.0.s8 %v1129
        %v1131 = vlaneseq
        %v1132 = vshrl.u32 %v1131, 7
        %v1133 = vsub.s32 %v1130, %v1132
        %v1134 = vrot.slane %v1120, %v1133
        %v1135 = vcombine.low %v1102, %v1118
        %v1136 = vcombine.high %v1102, %v1118
        %v1138 = vunpack.c.l.s4 1934713408
        %v1139 = vunpack.c.0.s8 %v1138
        %v1140 = vlaneseq
        %v1141 = vshrl.u32 %v1140, 7
        %v1142 = vsub.s32 %v1139, %v1141
        %v1143 = vrot.slane %v1135, %v1142
        %v1145 = vunpack.c.l.s4 1934713408
        %v1146 = vunpack.c.0.s8 %v1145
        %v1147 = vlaneseq
        %v1148 = vshrl.u32 %v1147, 7
        %v1149 = vsub.s32 %v1146, %v1148
        %v1150 = vrot.slane %v1136, %v1149
        %v1151 = vcombine.high %v1127, 0.0
        %v1152 = vcombine.high %v1134, 0.0
        %v1153 = vcombine.high %v1143, 0.0
        %v1154 = vcombine.high %v1150, 0.0
        %v1155 = vcombine.low %v1127, %v1134
        %v1157 = vunpack.c.l.s4 1983009808
        %v1158 = vunpack.c.0.s8 %v1157
        %v1159 = vlaneseq
        %v1160 = vshrl.u32 %v1159, 7
        %v1161 = vsub.s32 %v1158, %v1160
        %v1162 = vrot.slane %v1155, %v1161
        %v1163 = vcombine.low %v1151, %v1152
        %v1165 = vunpack.c.l.s4 1983009808
        %v1166 = vunpack.c.0.s8 %v1165
        %v1167 = vlaneseq
        %v1168 = vshrl.u32 %v1167, 7
        %v1169 = vsub.s32 %v1166, %v1168
        %v1170 = vrot.slane %v1163, %v1169
        %v1171 = vcombine.low %v1143, %v1150
        %v1173 = vunpack.c.l.s4 1983009808
        %v1174 = vunpack.c.0.s8 %v1173
        %v1175 = vlaneseq
        %v1176 = vshrl.u32 %v1175, 7
        %v1177 = vsub.s32 %v1174, %v1176
        %v1178 = vrot.slane %v1171, %v1177
        %v1179 = vcombine.low %v1153, %v1154
        %v1181 = vunpack.c.l.s4 1983009808
        %v1182 = vunpack.c.0.s8 %v1181
        %v1183 = vlaneseq
        %v1184 = vshrl.u32 %v1183, 7
        %v1185 = vsub.s32 %v1182, %v1184
        %v1186 = vrot.slane %v1179, %v1185
        %v1187 = vcombine.low %v1162, %v1170
        %v1188 = vcombine.high %v1162, %v1170
        %v1190 = vunpack.c.l.s4 1934713408
        %v1191 = vunpack.c.0.s8 %v1190
        %v1192 = vlaneseq
        %v1193 = vshrl.u32 %v1192, 7
        %v1194 = vsub.s32 %v1191, %v1193
        %v1195 = vrot.slane %v1187, %v1194
        %v1197 = vunpack.c.l.s4 1934713408
        %v1198 = vunpack.c.0.s8 %v1197
        %v1199 = vlaneseq
        %v1200 = vshrl.u32 %v1199, 7
        %v1201 = vsub.s32 %v1198, %v1200
        %v1202 = vrot.slane %v1188, %v1201
        %v1203 = vcombine.low %v1178, %v1186
        %v1204 = vcombine.high %v1178, %v1186
        %v1206 = vunpack.c.l.s4 1934713408
        %v1207 = vunpack.c.0.s8 %v1206
        %v1208 = vlaneseq
        %v1209 = vshrl.u32 %v1208, 7
        %v1210 = vsub.s32 %v1207, %v1209
        %v1211 = vrot.slane %v1203, %v1210
        %v1213 = vunpack.c.l.s4 1934713408
        %v1214 = vunpack.c.0.s8 %v1213
        %v1215 = vlaneseq
        %v1216 = vshrl.u32 %v1215, 7
        %v1217 = vsub.s32 %v1214, %v1216
        %v1218 = vrot.slane %v1204, %v1217
        %v1219 = vcombine.low %v1195, %v1211
        %v1220 = vcombine.high %v1195, %v1211
        %v1221 = vcombine.low %v1202, %v1218
        %v1222 = vcombine.high %v1202, %v1218
        %v1223 = vpack.c.bf16 %v1219, %v1219
        %v1224 = vpack.c.bf16 %v1220, %v1220
        %v1225 = vpack.c.bf16 %v1221, %v1221
        %v1226 = vpack.c.bf16 %v1222, %v1222
        %1227 = vst.msk [vmem:[%s561] sm:$0xf] %vm782, %v1223
        %1228 = vst.msk [vmem:[%s561 + $0x4] sm:$0xf] %vm782, %v1224
        %1229 = vst.msk [vmem:[%s561 + $0x8] sm:$0xf] %vm782, %v1225
        %1230 = vst.msk [vmem:[%s561 + $0xc] sm:$0xf] %vm782, %v1226
        %s1231 = sand.u32 %s269, 1
        %s1232 = scalar_lea.sflag [#allocation4], %s1231
        %s1233 = sand.u32 %s269, 1
        %s1234 = smul.addr %s1233, 16
        %s1235 = scalar_lea.vmem [#allocation13], %s1234
        %s1236 = sand.u32 %s37, 1
        %s1237 = scalar_lea.sflag [#allocation15], %s1236
        %s1238 = sand.u32 %s297, 1
        %s1239 = smul.addr %s1238, 16
        %s1240 = scalar_lea.vmem [#allocation14], %s1239
        %s1241 = sand.u32 %s37, 1
        %s1242 = scalar_lea.sflag [#allocation15], %s1241
        %s1243 = sand.u32 %s325, 1
        %s1244 = smul.addr %s1243, 16
        %s1245 = scalar_lea.vmem [#allocation16], %s1244
        // Predicated region
        $region81: #{tpu_custom_call.1} parent=55 // pred_check
          %p1246 = pneg %p279
        $region82: #{tpu_custom_call.1} parent=55 // pred_check_branch
          %1248 = sbr.rel (%p1246) target = $region84
        $region83: #{tpu_custom_call.1} parent=55 // pred_region
          %s1250 = ssub.s32 256, 256
          %1251 = vsyncadd %s1232, %s1250
          %s1252 = smul.addr %s41, 4
          %s1253 = sadd.s32 %s42, %s1252
          %s1254 = smul.addr %s1253, 64
          %s1255 = scalar_lea.hbm %s9, %s1254
          %s1256 = sshll.u32 %s1235, 4
          %s1257 = int_to_ptr.vmem [resolvable:$true] %s1256
          %1262 = dma.vmem_to_hbm [thread:$0]  %s1257, 256, %s1255, %s1232, 64, 64, 4
        $region84: #{tpu_custom_call.1} parent=55 // pred_fallthru
          _
        // Predicated region
        $region85: #{tpu_custom_call.1} parent=55 // pred_check
          %p1263 = pneg %p307
        $region86: #{tpu_custom_call.1} parent=55 // pred_check_branch
          %1265 = sbr.rel (%p1263) target = $region88
        $region87: #{tpu_custom_call.1} parent=55 // pred_region
          %s1267 = ssub.s32 256, 256
          %1268 = vsyncadd %s1237, %s1267
          %s1269 = smul.addr %s41, 4
          %s1270 = sadd.s32 %s42, %s1269
          %s1271 = smul.addr %s1270, 64
          %s1272 = scalar_lea.hbm %s10, %s1271
          %s1273 = sshll.u32 %s1240, 4
          %s1274 = int_to_ptr.vmem [resolvable:$true] %s1273
          %1279 = dma.vmem_to_hbm [thread:$0]  %s1274, 256, %s1272, %s1237, 64, 64, 4
        $region88: #{tpu_custom_call.1} parent=55 // pred_fallthru
          _
        // Predicated region
        $region89: #{tpu_custom_call.1} parent=55 // pred_check
          %p1280 = pneg %p335
        $region90: #{tpu_custom_call.1} parent=55 // pred_check_branch
          %1282 = sbr.rel (%p1280) target = $region92
        $region91: #{tpu_custom_call.1} parent=55 // pred_region
          %s1284 = ssub.s32 256, 256
          %1285 = vsyncadd %s1242, %s1284
          %s1286 = smul.addr %s41, 4
          %s1287 = sadd.s32 %s42, %s1286
          %s1288 = smul.addr %s1287, 64
          %s1289 = scalar_lea.hbm %s11, %s1288
          %s1290 = sshll.u32 %s1245, 4
          %s1291 = int_to_ptr.vmem [resolvable:$true] %s1290
          %1296 = dma.vmem_to_hbm [thread:$0]  %s1291, 256, %s1289, %s1242, 64, 64, 4
        $region92: #{tpu_custom_call.1} parent=55 // pred_fallthru
          _
      $region56: #{tpu_custom_call.1} parent=5 // pred_fallthru
        _
      %p1297 = scmp.le.s32.totalorder 2, %s32
      // Predicated region
      $region93: #{tpu_custom_call.1} parent=5 // pred_check
        %p1298 = pneg %p1297
      $region94: #{tpu_custom_call.1} parent=5 // pred_check_branch
        %1300 = sbr.rel (%p1298) target = $region96
      $region95: #{tpu_custom_call.1} parent=5 // pred_region
        %s1301 = ssub.s32 %s32, 2
        // Predicated region
        $region97: #{tpu_custom_call.1} parent=95 // pred_check
          %p1302 = pneg %p285
        $region98: #{tpu_custom_call.1} parent=95 // pred_check_branch
          %1304 = sbr.rel (%p1302) target = $region100
        $region99: #{tpu_custom_call.1} parent=95 // pred_region
          %s1305 = sand.u32 %s270, 1
          %s1306 = scalar_lea.sflag [#allocation4], %s1305
          %s1307 = sand.u32 %s270, 1
          %s1308 = smul.addr %s1307, 16
          %s1309 = scalar_lea.vmem [#allocation13], %s1308
          %1310 = dma.done %s1306, 256
        $region100: #{tpu_custom_call.1} parent=95 // pred_fallthru
          _
        // Predicated region
        $region101: #{tpu_custom_call.1} parent=95 // pred_check
          %p1311 = pneg %p313
        $region102: #{tpu_custom_call.1} parent=95 // pred_check_branch
          %1313 = sbr.rel (%p1311) target = $region104
        $region103: #{tpu_custom_call.1} parent=95 // pred_region
          %s1314 = sand.u32 %s38, 1
          %s1315 = scalar_lea.sflag [#allocation15], %s1314
          %s1316 = sand.u32 %s298, 1
          %s1317 = smul.addr %s1316, 16
          %s1318 = scalar_lea.vmem [#allocation14], %s1317
          %1319 = dma.done %s1315, 256
        $region104: #{tpu_custom_call.1} parent=95 // pred_fallthru
          _
        // Predicated region
        $region105: #{tpu_custom_call.1} parent=95 // pred_check
          %p1320 = pneg %p341
        $region106: #{tpu_custom_call.1} parent=95 // pred_check_branch
          %1322 = sbr.rel (%p1320) target = $region108
        $region107: #{tpu_custom_call.1} parent=95 // pred_region
          %s1323 = sand.u32 %s38, 1
          %s1324 = scalar_lea.sflag [#allocation15], %s1323
          %s1325 = sand.u32 %s326, 1
          %s1326 = smul.addr %s1325, 16
          %s1327 = scalar_lea.vmem [#allocation16], %s1326
          %1328 = dma.done %s1324, 256
        $region108: #{tpu_custom_call.1} parent=95 // pred_fallthru
          _
      $region96: #{tpu_custom_call.1} parent=5 // pred_fallthru
        _
    $region6: #{tpu_custom_call.1} parent=1 // loop_footer
      %s36 = sadd.s32 1, %s32
    $region7: #{tpu_custom_call.1} parent=1 // loop_footer_branch
      %31 = sbr.rel target = $region3
    $region8: #{tpu_custom_call.1} parent=1 // loop_exit
      _
    %1329 = vsyncpa [#allocation3], 1
    %s1330 = scalar_lea.sflag [#allocation3], 1
    %1331 = vsyncpa %s1330, 1
    %1332 = vsyncpa [#allocation6], 1
    %s1333 = scalar_lea.sflag [#allocation6], 1
    %1334 = vsyncpa %s1333, 1
    %1335 = vsyncpa [#allocation9], 1
    %1336 = vsyncpa [#allocation12], 1
    %1337 = vsyncpa [#allocation4], 1
    %s1338 = scalar_lea.sflag [#allocation4], 1
    %1339 = vsyncpa %s1338, 1
    %1340 = vsyncpa [#allocation15], 1
    %s1341 = scalar_lea.sflag [#allocation15], 1
    %1342 = vsyncpa %s1341, 1

</llo_original>
